<compile_context>
chip_gen: v6e
topology: v6e:2x2x1
jax: 0.10.0
libtpu: 0.0.40
codegen_flags: <defaults>
</compile_context>

<pallas_src>
import jax
import jax.numpy as jnp
from jax.experimental import pallas as pl
from jax.experimental.pallas import tpu as pltpu

K_RAW, K_PAD = 28 * 28, 896          # 896 = 7 * 128 (lane-dense contraction dim)
H_DIM = 512
OUT_RAW, OUT_PAD = 10, 128           # pad logits to one full lane group


def _round_up(n, m):
    return ((n + m - 1) // m) * m


def _choose_tb(B):
    """Batch tile: multiple of 16 (bf16 LHS sublane packing); >=2 grid steps
    once the batch is big enough (v7x has 2 TensorCores); tiles grow toward
    ~1024 rows for large batches to amortize per-grid-step overhead while
    keeping padding waste minimal."""
    b16 = _round_up(max(B, 1), 16)
    if b16 <= 32:
        return b16                                   # tiny batch: single step
    steps = max(2, -(-b16 // 1024))                  # >=2 steps, <=~1024-row tiles
    return _round_up(-(-b16 // steps), 16)


def _mlp_kernel(x_ref, w1_ref, b1_ref, w2_ref, b2_ref, w3_ref, b3_ref, o_ref):
    # x: (TB, 896) bf16, w1: (896, 512) bf16, w2: (512, 512) bf16,
    # w3: (512, 128) bf16, biases f32, output (TB, 128) f32.
    x = x_ref[...]
    h1 = jnp.dot(x, w1_ref[...], preferred_element_type=jnp.float32) + b1_ref[...]
    h1 = jnp.maximum(h1, 0.0).astype(jnp.bfloat16)
    h2 = jnp.dot(h1, w2_ref[...], preferred_element_type=jnp.float32) + b2_ref[...]
    h2 = jnp.maximum(h2, 0.0).astype(jnp.bfloat16)
    logits = jnp.dot(h2, w3_ref[...], preferred_element_type=jnp.float32) + b3_ref[...]
    o_ref[...] = logits


@jax.jit
def mlp_forward(x_nchw, w1, b1, w2, b2, w3, b3):
    """x_nchw: (B, 1, 28, 28) f32.  w*/b* must come from prepare_params()."""
    B = x_nchw.shape[0]

    # Glue (plain JAX): flatten -> cast to bf16 -> lane/batch pad (one pass).
    x = x_nchw.reshape(B, -1).astype(jnp.bfloat16)

    TB = _choose_tb(B)
    B_pad = _round_up(B, TB)
    x = jnp.pad(x, ((0, B_pad - B), (0, K_PAD - x.shape[1])))

    grid = (B_pad // TB,)

    def resident(shape):
        # Constant index_map -> block stays VMEM-resident across grid steps;
        # Buffered(1) drops the (useless) second pipeline buffer for it.
        return pl.BlockSpec(shape, lambda i: tuple(0 for _ in shape),
                            pipeline_mode=pl.Buffered(1))

    flops = 2 * B_pad * (K_PAD * H_DIM + H_DIM * H_DIM + H_DIM * OUT_PAD)
    bytes_accessed = (
        B_pad * K_PAD * 2                                        # x (bf16)
        + (K_PAD * H_DIM + H_DIM * H_DIM + H_DIM * OUT_PAD) * 2  # weights (bf16)
        + (2 * H_DIM + OUT_PAD) * 4                              # biases (f32)
        + B_pad * OUT_PAD * 4                                    # logits (f32)
    )

    out_padded = pl.pallas_call(
        _mlp_kernel,
        out_shape=jax.ShapeDtypeStruct((B_pad, OUT_PAD), jnp.float32),
        grid=grid,
        in_specs=[
            pl.BlockSpec((TB, K_PAD), lambda i: (i, 0)),   # x tile per grid step
            resident((K_PAD, H_DIM)),                      # w1 (VMEM-resident)
            resident((1, H_DIM)),                          # b1
            resident((H_DIM, H_DIM)),                      # w2
            resident((1, H_DIM)),                          # b2
            resident((H_DIM, OUT_PAD)),                    # w3
            resident((1, OUT_PAD)),                        # b3
        ],
        out_specs=pl.BlockSpec((TB, OUT_PAD), lambda i: (i, 0)),
        compiler_params=pltpu.CompilerParams(
            dimension_semantics=("parallel",),
            vmem_limit_bytes=48 * 1024 * 1024,
        ),
        cost_estimate=pl.CostEstimate(
            flops=flops, transcendentals=0, bytes_accessed=bytes_accessed),
    )(x, w1, b1, w2, b2, w3, b3)

    return out_padded[:B, :OUT_RAW]


def init_params(key):
    """PyTorch-like nn.Linear init (uniform +/- 1/sqrt(fan_in)), f32, raw shapes."""
    def linear(key, fan_in, fan_out):
        kw, kb = jax.random.split(key)
        bound = 1.0 / jnp.sqrt(fan_in)
        w = jax.random.uniform(kw, (fan_in, fan_out), jnp.float32, -bound, bound)
        b = jax.random.uniform(kb, (1, fan_out), jnp.float32, -bound, bound)
        return w, b

    k1, k2, k3 = jax.random.split(key, 3)
    w1, b1 = linear(k1, K_RAW, H_DIM)
    w2, b2 = linear(k2, H_DIM, H_DIM)
    w3, b3 = linear(k3, H_DIM, OUT_RAW)
    return w1, b1, w2, b2, w3, b3


def prepare_params(w1, b1, w2, b2, w3, b3):
    """One-time: zero-pad to lane-dense shapes, weights -> bf16, biases stay f32."""
    w1p = jnp.pad(w1, ((0, K_PAD - w1.shape[0]), (0, 0))).astype(jnp.bfloat16)
    w2p = w2.astype(jnp.bfloat16)
    w3p = jnp.pad(w3, ((0, 0), (0, OUT_PAD - w3.shape[1]))).astype(jnp.bfloat16)
    b3p = jnp.pad(b3, ((0, 0), (0, OUT_PAD - b3.shape[1]))).astype(jnp.float32)
    return w1p, b1.astype(jnp.float32), w2p, b2.astype(jnp.float32), w3p, b3p


def _reference_f32(x_nchw, w1, b1, w2, b2, w3, b3):
    x = x_nchw.reshape(x_nchw.shape[0], -1)
    h1 = jnp.maximum(x @ w1 + b1, 0.0)
    h2 = jnp.maximum(h1 @ w2 + b2, 0.0)
    return h2 @ w3 + b3


def _reference_bf16(x_nchw, w1, b1, w2, b2, w3, b3):
    """Emulates the kernel's mixed precision (bf16 matmul operands, f32 accum)."""
    f = lambda a: a.astype(jnp.bfloat16)
    x = f(x_nchw.reshape(x_nchw.shape[0], -1))
    h1 = jnp.maximum(jnp.dot(x, f(w1), preferred_element_type=jnp.float32) + b1, 0.0)
    h2 = jnp.maximum(jnp.dot(f(h1), f(w2), preferred_element_type=jnp.float32) + b2, 0.0)
    return jnp.dot(f(h2), f(w3), preferred_element_type=jnp.float32) + b3


if __name__ == "__main__":
    key = jax.random.PRNGKey(0)
    kx, kx2, kp = jax.random.split(key, 3)

    params = init_params(kp)
    prepped = prepare_params(*params)   # bf16 + lane-padded, done once

    # Small MNIST-like batch: (B, C, H, W) = (8, 1, 28, 28) -> single grid step
    # with a 16-row (bf16-packed) tile.
    x = jax.random.normal(kx, (8, 1, 28, 28), dtype=jnp.float32)
    out = jax.block_until_ready(mlp_forward(x, *prepped))
    assert out.shape == (8, 10), out.shape

    # Tight check vs a reference that uses the same mixed precision as the kernel.
    ref_bf16 = _reference_bf16(x, *params)
    assert jnp.allclose(out, ref_bf16, atol=1e-2, rtol=1e-2), "mismatch vs bf16-emulating reference"
    # Loose sanity check vs the pure-f32 PyTorch-equivalent math.
    # NOTE: the kernel intentionally runs matmuls with bf16 operands (f32 accum),
    # so this tolerance is a data-dependent sanity bound, not an exactness claim.
    ref_f32 = _reference_f32(x, *params)
    assert jnp.allclose(out, ref_f32, atol=5e-2, rtol=5e-2), "mismatch vs f32 reference"

    # Second, non-multiple batch (B=40) exercises the >=2-grid-step path
    # (padding + v7x two-TensorCore sharding of the batch axis).
    x2 = jax.random.normal(kx2, (40, 1, 28, 28), dtype=jnp.float32)
    out2 = jax.block_until_ready(mlp_forward(x2, *prepped))
    assert out2.shape == (40, 10), out2.shape
    ref2 = _reference_bf16(x2, *params)
    assert jnp.allclose(out2, ref2, atol=2e-2, rtol=2e-2), "mismatch vs bf16 reference (B=40)"

    print("KERNEL_OK")
</pallas_src>

<mosaic_0001>
module attributes {stable_mosaic.version = 11 : i64} {
  func.func @_mlp_kernel(%arg0: i32, %arg1: memref<16x896xbf16, #tpu.memory_space<vmem>>, %arg2: memref<896x512xbf16, #tpu.memory_space<vmem>>, %arg3: memref<1x512xf32, #tpu.memory_space<vmem>>, %arg4: memref<512x512xbf16, #tpu.memory_space<vmem>>, %arg5: memref<1x512xf32, #tpu.memory_space<vmem>>, %arg6: memref<512x128xbf16, #tpu.memory_space<vmem>>, %arg7: memref<1x128xf32, #tpu.memory_space<vmem>>, %arg8: memref<16x128xf32, #tpu.memory_space<vmem>>) attributes {dimension_semantics = [#tpu.dimension_semantics<parallel>], iteration_bounds = array<i64: 1>, scalar_prefetch = 0 : i64, scratch_operands = 0 : i64, tpu.core_type = #tpu.core_type<tc>, window_params = [{transform_indices = @transform_0, window_bounds = array<i64: 16, 896>}, {pipeline_mode = #tpu.pipeline_mode<synchronous>, transform_indices = @transform_1, window_bounds = array<i64: 896, 512>}, {pipeline_mode = #tpu.pipeline_mode<synchronous>, transform_indices = @transform_2, window_bounds = array<i64: 1, 512>}, {pipeline_mode = #tpu.pipeline_mode<synchronous>, transform_indices = @transform_3, window_bounds = array<i64: 512, 512>}, {pipeline_mode = #tpu.pipeline_mode<synchronous>, transform_indices = @transform_4, window_bounds = array<i64: 1, 512>}, {pipeline_mode = #tpu.pipeline_mode<synchronous>, transform_indices = @transform_5, window_bounds = array<i64: 512, 128>}, {pipeline_mode = #tpu.pipeline_mode<synchronous>, transform_indices = @transform_6, window_bounds = array<i64: 1, 128>}, {transform_indices = @transform_7, window_bounds = array<i64: 16, 128>}]} {
    %c0 = arith.constant 0 : index
    %c0_0 = arith.constant 0 : index
    %0 = vector.load %arg1[%c0, %c0_0] : memref<16x896xbf16, #tpu.memory_space<vmem>>, vector<16x896xbf16>
    %c0_1 = arith.constant 0 : index
    %c0_2 = arith.constant 0 : index
    %1 = vector.load %arg2[%c0_1, %c0_2] : memref<896x512xbf16, #tpu.memory_space<vmem>>, vector<896x512xbf16>
    %cst = arith.constant dense<0.000000e+00> : vector<16x512xf32>
    %2 = tpu.matmul %0, %1, %cst {dimension_numbers = #tpu.dot_dimension_numbers<[1], [0], [0], [1], [0, 0, 1, 1], [], []>} : vector<16x896xbf16>, vector<896x512xbf16>, vector<16x512xf32> -> vector<16x512xf32>
    %c0_3 = arith.constant 0 : index
    %c0_4 = arith.constant 0 : index
    %3 = vector.load %arg3[%c0_3, %c0_4] : memref<1x512xf32, #tpu.memory_space<vmem>>, vector<1x512xf32>
    %4 = vector.broadcast %3 : vector<1x512xf32> to vector<16x512xf32>
    %5 = arith.addf %2, %4 : vector<16x512xf32>
    %cst_5 = arith.constant 0.000000e+00 : f32
    %6 = vector.broadcast %cst_5 : f32 to vector<16x512xf32>
    %7 = arith.maximumf %5, %6 : vector<16x512xf32>
    %8 = arith.truncf %7 : vector<16x512xf32> to vector<16x512xbf16>
    %c0_6 = arith.constant 0 : index
    %c0_7 = arith.constant 0 : index
    %9 = vector.load %arg4[%c0_6, %c0_7] : memref<512x512xbf16, #tpu.memory_space<vmem>>, vector<512x512xbf16>
    %cst_8 = arith.constant dense<0.000000e+00> : vector<16x512xf32>
    %10 = tpu.matmul %8, %9, %cst_8 {dimension_numbers = #tpu.dot_dimension_numbers<[1], [0], [0], [1], [0, 0, 1, 1], [], []>} : vector<16x512xbf16>, vector<512x512xbf16>, vector<16x512xf32> -> vector<16x512xf32>
    %c0_9 = arith.constant 0 : index
    %c0_10 = arith.constant 0 : index
    %11 = vector.load %arg5[%c0_9, %c0_10] : memref<1x512xf32, #tpu.memory_space<vmem>>, vector<1x512xf32>
    %12 = vector.broadcast %11 : vector<1x512xf32> to vector<16x512xf32>
    %13 = arith.addf %10, %12 : vector<16x512xf32>
    %cst_11 = arith.constant 0.000000e+00 : f32
    %14 = vector.broadcast %cst_11 : f32 to vector<16x512xf32>
    %15 = arith.maximumf %13, %14 : vector<16x512xf32>
    %16 = arith.truncf %15 : vector<16x512xf32> to vector<16x512xbf16>
    %c0_12 = arith.constant 0 : index
    %c0_13 = arith.constant 0 : index
    %17 = vector.load %arg6[%c0_12, %c0_13] : memref<512x128xbf16, #tpu.memory_space<vmem>>, vector<512x128xbf16>
    %cst_14 = arith.constant dense<0.000000e+00> : vector<16x128xf32>
    %18 = tpu.matmul %16, %17, %cst_14 {dimension_numbers = #tpu.dot_dimension_numbers<[1], [0], [0], [1], [0, 0, 1, 1], [], []>} : vector<16x512xbf16>, vector<512x128xbf16>, vector<16x128xf32> -> vector<16x128xf32>
    %c0_15 = arith.constant 0 : index
    %c0_16 = arith.constant 0 : index
    %19 = vector.load %arg7[%c0_15, %c0_16] : memref<1x128xf32, #tpu.memory_space<vmem>>, vector<1x128xf32>
    %20 = vector.broadcast %19 : vector<1x128xf32> to vector<16x128xf32>
    %21 = arith.addf %18, %20 : vector<16x128xf32>
    %c0_17 = arith.constant 0 : index
    %c0_18 = arith.constant 0 : index
    %22 = vector.load %arg8[%c0_17, %c0_18] : memref<16x128xf32, #tpu.memory_space<vmem>>, vector<16x128xf32>
    tpu.vector_store %arg8[%c0_17, %c0_18], %21 {strides = array<i32>} : memref<16x128xf32, #tpu.memory_space<vmem>>, vector<16x128xf32>,
    return
  }
  func.func @transform_0(%arg0: i32) -> (i32, i32) {
    %c0_i32 = arith.constant 0 : i32
    %c0_i32_0 = arith.constant 0 : i32
    return %arg0, %c0_i32 : i32, i32
  }
  func.func @transform_1(%arg0: i32) -> (i32, i32) {
    %c0_i32 = arith.constant 0 : i32
    %c0_i32_0 = arith.constant 0 : i32
    %c0_i32_1 = arith.constant 0 : i32
    return %c0_i32, %c0_i32_0 : i32, i32
  }
  func.func @transform_2(%arg0: i32) -> (i32, i32) {
    %c0_i32 = arith.constant 0 : i32
    %c0_i32_0 = arith.constant 0 : i32
    %c0_i32_1 = arith.constant 0 : i32
    return %c0_i32, %c0_i32_0 : i32, i32
  }
  func.func @transform_3(%arg0: i32) -> (i32, i32) {
    %c0_i32 = arith.constant 0 : i32
    %c0_i32_0 = arith.constant 0 : i32
    %c0_i32_1 = arith.constant 0 : i32
    return %c0_i32, %c0_i32_0 : i32, i32
  }
  func.func @transform_4(%arg0: i32) -> (i32, i32) {
    %c0_i32 = arith.constant 0 : i32
    %c0_i32_0 = arith.constant 0 : i32
    %c0_i32_1 = arith.constant 0 : i32
    return %c0_i32, %c0_i32_0 : i32, i32
  }
  func.func @transform_5(%arg0: i32) -> (i32, i32) {
    %c0_i32 = arith.constant 0 : i32
    %c0_i32_0 = arith.constant 0 : i32
    %c0_i32_1 = arith.constant 0 : i32
    return %c0_i32, %c0_i32_0 : i32, i32
  }
  func.func @transform_6(%arg0: i32) -> (i32, i32) {
    %c0_i32 = arith.constant 0 : i32
    %c0_i32_0 = arith.constant 0 : i32
    %c0_i32_1 = arith.constant 0 : i32
    return %c0_i32, %c0_i32_0 : i32, i32
  }
  func.func @transform_7(%arg0: i32) -> (i32, i32) {
    %c0_i32 = arith.constant 0 : i32
    %c0_i32_0 = arith.constant 0 : i32
    return %arg0, %c0_i32 : i32, i32
  }
}

</mosaic_0001>

<llo_original>
// kernel: mlp_forward.1
$region0: #{mlp_forward.1}
  #allocation0 [shape = 'u32[]', space=smem, size = 0x4, offset = 0x4, fixed_abs, tag = 'smem constant byte address 0x4 - core index']
  #allocation1 [shape = 'u32[144,128]{1,0:T(1,128)}', space=vmem, size = 0x12000, scoped, tag = 'internal scratch']
  %s0 = inlined_call_operand.vmem [shape: bf16[16,896], index: 0, kind: input, shape index: {}]
  %s1 = inlined_call_operand.hbm [shape: bf16[896,512], index: 1, kind: input, shape index: {}]
  %s2 = inlined_call_operand.vmem [shape: f32[1,512], index: 2, kind: input, shape index: {}]
  %s3 = inlined_call_operand.hbm [shape: bf16[512,512], index: 3, kind: input, shape index: {}]
  %s4 = inlined_call_operand.vmem [shape: f32[1,512], index: 4, kind: input, shape index: {}]
  %s5 = inlined_call_operand.vmem [shape: bf16[512,128], index: 5, kind: input, shape index: {}]
  %s6 = inlined_call_operand.vmem [shape: f32[1,128], index: 6, kind: input, shape index: {}]
  %s7 = inlined_call_operand.vmem [shape: f32[16,128], index: 7, kind: output, shape index: {}]
  %s8 = sld [smem:[#allocation0]]
  $region46: #{mlp_forward.1} parent=0
    _
  %s10 = ssub.s32 1, %s8
  %s11 = scalar_select 0, %s10, %s8
  $region1: #{mlp_forward.1} parent=0
    #allocation2 [shape = 'u8[917504]{0}', space=vmem, size = 0xe0000, scoped, tag = 'input window, operand 1, single buffered']
    #allocation3 [shape = 's32[1]{0}', space=sflag, size = 0x4, scoped, tag = 'scoped memory for mlp_forward.1']
    #allocation4 [shape = 'u8[524288]{0}', space=vmem, size = 0x80000, scoped, tag = 'input window, operand 3, single buffered']
    #allocation5 [shape = 's32[1]{0}', space=sflag, size = 0x4, scoped, tag = 'scoped memory for mlp_forward.1']
    %12 = vsyncpa [#allocation3], 0
    %13 = vsyncpa [#allocation5], 0
    // Predicated region
    $region2: #{mlp_forward.1} parent=1 // pred_check
      _
    $region3: #{mlp_forward.1} parent=1 // pred_check_branch
      %15 = sbr.rel (0) target = $region5
    $region4: #{mlp_forward.1} parent=1 // pred_region
      _
    $region5: #{mlp_forward.1} parent=1 // pred_fallthru
      _
    // Predicated region
    $region6: #{mlp_forward.1} parent=1 // pred_check
      _
    $region7: #{mlp_forward.1} parent=1 // pred_check_branch
      %17 = sbr.rel (0) target = $region9
    $region8: #{mlp_forward.1} parent=1 // pred_region
      %s19 = ssub.s32 28672, 28672
      %20 = vsyncadd [#allocation3], %s19
      %s21 = sshll.u32 [#allocation2], 4
      %s22 = int_to_ptr.vmem [resolvable:$true] %s21
      %27 = dma.hbm_to_vmem [thread:$0]  %s1, 28672, %s22, [#allocation3], 256, 256, 16
    $region9: #{mlp_forward.1} parent=1 // pred_fallthru
      _
    // Predicated region
    $region10: #{mlp_forward.1} parent=1 // pred_check
      _
    $region11: #{mlp_forward.1} parent=1 // pred_check_branch
      %29 = sbr.rel (0) target = $region13
    $region12: #{mlp_forward.1} parent=1 // pred_region
      _
    $region13: #{mlp_forward.1} parent=1 // pred_fallthru
      _
    // Predicated region
    $region14: #{mlp_forward.1} parent=1 // pred_check
      _
    $region15: #{mlp_forward.1} parent=1 // pred_check_branch
      %31 = sbr.rel (0) target = $region17
    $region16: #{mlp_forward.1} parent=1 // pred_region
      %s33 = ssub.s32 16384, 16384
      %34 = vsyncadd [#allocation5], %s33
      %s35 = sshll.u32 [#allocation4], 4
      %s36 = int_to_ptr.vmem [resolvable:$true] %s35
      %41 = dma.hbm_to_vmem [thread:$0]  %s3, 16384, %s36, [#allocation5], 256, 256, 16
    $region17: #{mlp_forward.1} parent=1 // pred_fallthru
      _
    // Predicated region
    $region18: #{mlp_forward.1} parent=1 // pred_check
      _
    $region19: #{mlp_forward.1} parent=1 // pred_check_branch
      %43 = sbr.rel (0) target = $region21
    $region20: #{mlp_forward.1} parent=1 // pred_region
      _
    $region21: #{mlp_forward.1} parent=1 // pred_fallthru
      _
    // Predicated region
    $region22: #{mlp_forward.1} parent=1 // pred_check
      _
    $region23: #{mlp_forward.1} parent=1 // pred_check_branch
      %45 = sbr.rel (0) target = $region25
    $region24: #{mlp_forward.1} parent=1 // pred_region
      _
    $region25: #{mlp_forward.1} parent=1 // pred_fallthru
      _
    // Predicated region
    $region26: #{mlp_forward.1} parent=1 // pred_check
      _
    $region27: #{mlp_forward.1} parent=1 // pred_check_branch
      %47 = sbr.rel (0) target = $region29
    $region28: #{mlp_forward.1} parent=1 // pred_region
      _
    $region29: #{mlp_forward.1} parent=1 // pred_fallthru
      _
    // Predicated region
    $region30: #{mlp_forward.1} parent=1 // pred_check
      _
    $region31: #{mlp_forward.1} parent=1 // pred_check_branch
      %49 = sbr.rel (0) target = $region33
    $region32: #{mlp_forward.1} parent=1 // pred_region
      %50 = dma.done [#allocation3], 28672
    $region33: #{mlp_forward.1} parent=1 // pred_fallthru
      _
    // Predicated region
    $region34: #{mlp_forward.1} parent=1 // pred_check
      _
    $region35: #{mlp_forward.1} parent=1 // pred_check_branch
      %52 = sbr.rel (0) target = $region37
    $region36: #{mlp_forward.1} parent=1 // pred_region
      %53 = dma.done [#allocation5], 16384
    $region37: #{mlp_forward.1} parent=1 // pred_fallthru
      _
    %v55 = vld [vmem:[%s0] sm:$0xff]
    %v56 = vld [vmem:[%s0 + $0x8] sm:$0xff]
    %v57 = vld [vmem:[%s0 + $0x10] sm:$0xff]
    %v58 = vld [vmem:[%s0 + $0x18] sm:$0xf]
    %v59 = vld [vmem:[%s0 + $0x1c] sm:$0xff]
    %v60 = vld [vmem:[%s0 + $0x24] sm:$0xff]
    %v61 = vld [vmem:[%s0 + $0x2c] sm:$0xff]
    %v62 = vld [vmem:[%s0 + $0x34] sm:$0xf]
    %v63 = vld [vmem:[#allocation2] sm:$0xff]
    %v64 = vld [vmem:[#allocation2 + $0x8] sm:$0xff]
    %v65 = vld [vmem:[#allocation2 + $0x10] sm:$0xff]
    %v66 = vld [vmem:[#allocation2 + $0x18] sm:$0xff]
    %v67 = vld [vmem:[#allocation2 + $0x20] sm:$0xff]
    %v68 = vld [vmem:[#allocation2 + $0x28] sm:$0xff]
    %v69 = vld [vmem:[#allocation2 + $0x30] sm:$0xff]
    %v70 = vld [vmem:[#allocation2 + $0x38] sm:$0xff]
    %v71 = vld [vmem:[#allocation2 + $0x40] sm:$0xff]
    %v72 = vld [vmem:[#allocation2 + $0x48] sm:$0xff]
    %v73 = vld [vmem:[#allocation2 + $0x50] sm:$0xff]
    %v74 = vld [vmem:[#allocation2 + $0x58] sm:$0xff]
    %v75 = vld [vmem:[#allocation2 + $0x60] sm:$0xff]
    %v76 = vld [vmem:[#allocation2 + $0x68] sm:$0xff]
    %v77 = vld [vmem:[#allocation2 + $0x70] sm:$0xff]
    %v78 = vld [vmem:[#allocation2 + $0x78] sm:$0xff]
    %v79 = vld [vmem:[#allocation2 + $0x80] sm:$0xff]
    %v80 = vld [vmem:[#allocation2 + $0x88] sm:$0xff]
    %v81 = vld [vmem:[#allocation2 + $0x90] sm:$0xff]
    %v82 = vld [vmem:[#allocation2 + $0x98] sm:$0xff]
    %v83 = vld [vmem:[#allocation2 + $0xa0] sm:$0xff]
    %v84 = vld [vmem:[#allocation2 + $0xa8] sm:$0xff]
    %v85 = vld [vmem:[#allocation2 + $0xb0] sm:$0xff]
    %v86 = vld [vmem:[#allocation2 + $0xb8] sm:$0xff]
    %v87 = vld [vmem:[#allocation2 + $0xc0] sm:$0xff]
    %v88 = vld [vmem:[#allocation2 + $0xc8] sm:$0xff]
    %v89 = vld [vmem:[#allocation2 + $0xd0] sm:$0xff]
    %v90 = vld [vmem:[#allocation2 + $0xd8] sm:$0xff]
    %v91 = vld [vmem:[#allocation2 + $0xe0] sm:$0xff]
    %v92 = vld [vmem:[#allocation2 + $0xe8] sm:$0xff]
    %v93 = vld [vmem:[#allocation2 + $0xf0] sm:$0xff]
    %v94 = vld [vmem:[#allocation2 + $0xf8] sm:$0xff]
    %v95 = vld [vmem:[#allocation2 + $0x100] sm:$0xff]
    %v96 = vld [vmem:[#allocation2 + $0x108] sm:$0xff]
    %v97 = vld [vmem:[#allocation2 + $0x110] sm:$0xff]
    %v98 = vld [vmem:[#allocation2 + $0x118] sm:$0xff]
    %v99 = vld [vmem:[#allocation2 + $0x120] sm:$0xff]
    %v100 = vld [vmem:[#allocation2 + $0x128] sm:$0xff]
    %v101 = vld [vmem:[#allocation2 + $0x130] sm:$0xff]
    %v102 = vld [vmem:[#allocation2 + $0x138] sm:$0xff]
    %v103 = vld [vmem:[#allocation2 + $0x140] sm:$0xff]
    %v104 = vld [vmem:[#allocation2 + $0x148] sm:$0xff]
    %v105 = vld [vmem:[#allocation2 + $0x150] sm:$0xff]
    %v106 = vld [vmem:[#allocation2 + $0x158] sm:$0xff]
    %v107 = vld [vmem:[#allocation2 + $0x160] sm:$0xff]
    %v108 = vld [vmem:[#allocation2 + $0x168] sm:$0xff]
    %v109 = vld [vmem:[#allocation2 + $0x170] sm:$0xff]
    %v110 = vld [vmem:[#allocation2 + $0x178] sm:$0xff]
    %v111 = vld [vmem:[#allocation2 + $0x180] sm:$0xff]
    %v112 = vld [vmem:[#allocation2 + $0x188] sm:$0xff]
    %v113 = vld [vmem:[#allocation2 + $0x190] sm:$0xff]
    %v114 = vld [vmem:[#allocation2 + $0x198] sm:$0xff]
    %v115 = vld [vmem:[#allocation2 + $0x1a0] sm:$0xff]
    %v116 = vld [vmem:[#allocation2 + $0x1a8] sm:$0xff]
    %v117 = vld [vmem:[#allocation2 + $0x1b0] sm:$0xff]
    %v118 = vld [vmem:[#allocation2 + $0x1b8] sm:$0xff]
    %v119 = vld [vmem:[#allocation2 + $0x1c0] sm:$0xff]
    %v120 = vld [vmem:[#allocation2 + $0x1c8] sm:$0xff]
    %v121 = vld [vmem:[#allocation2 + $0x1d0] sm:$0xff]
    %v122 = vld [vmem:[#allocation2 + $0x1d8] sm:$0xff]
    %v123 = vld [vmem:[#allocation2 + $0x1e0] sm:$0xff]
    %v124 = vld [vmem:[#allocation2 + $0x1e8] sm:$0xff]
    %v125 = vld [vmem:[#allocation2 + $0x1f0] sm:$0xff]
    %v126 = vld [vmem:[#allocation2 + $0x1f8] sm:$0xff]
    %v127 = vld [vmem:[#allocation2 + $0x200] sm:$0xff]
    %v128 = vld [vmem:[#allocation2 + $0x208] sm:$0xff]
    %v129 = vld [vmem:[#allocation2 + $0x210] sm:$0xff]
    %v130 = vld [vmem:[#allocation2 + $0x218] sm:$0xff]
    %v131 = vld [vmem:[#allocation2 + $0x220] sm:$0xff]
    %v132 = vld [vmem:[#allocation2 + $0x228] sm:$0xff]
    %v133 = vld [vmem:[#allocation2 + $0x230] sm:$0xff]
    %v134 = vld [vmem:[#allocation2 + $0x238] sm:$0xff]
    %v135 = vld [vmem:[#allocation2 + $0x240] sm:$0xff]
    %v136 = vld [vmem:[#allocation2 + $0x248] sm:$0xff]
    %v137 = vld [vmem:[#allocation2 + $0x250] sm:$0xff]
    %v138 = vld [vmem:[#allocation2 + $0x258] sm:$0xff]
    %v139 = vld [vmem:[#allocation2 + $0x260] sm:$0xff]
    %v140 = vld [vmem:[#allocation2 + $0x268] sm:$0xff]
    %v141 = vld [vmem:[#allocation2 + $0x270] sm:$0xff]
    %v142 = vld [vmem:[#allocation2 + $0x278] sm:$0xff]
    %v143 = vld [vmem:[#allocation2 + $0x280] sm:$0xff]
    %v144 = vld [vmem:[#allocation2 + $0x288] sm:$0xff]
    %v145 = vld [vmem:[#allocation2 + $0x290] sm:$0xff]
    %v146 = vld [vmem:[#allocation2 + $0x298] sm:$0xff]
    %v147 = vld [vmem:[#allocation2 + $0x2a0] sm:$0xff]
    %v148 = vld [vmem:[#allocation2 + $0x2a8] sm:$0xff]
    %v149 = vld [vmem:[#allocation2 + $0x2b0] sm:$0xff]
    %v150 = vld [vmem:[#allocation2 + $0x2b8] sm:$0xff]
    %v151 = vld [vmem:[#allocation2 + $0x2c0] sm:$0xff]
    %v152 = vld [vmem:[#allocation2 + $0x2c8] sm:$0xff]
    %v153 = vld [vmem:[#allocation2 + $0x2d0] sm:$0xff]
    %v154 = vld [vmem:[#allocation2 + $0x2d8] sm:$0xff]
    %v155 = vld [vmem:[#allocation2 + $0x2e0] sm:$0xff]
    %v156 = vld [vmem:[#allocation2 + $0x2e8] sm:$0xff]
    %v157 = vld [vmem:[#allocation2 + $0x2f0] sm:$0xff]
    %v158 = vld [vmem:[#allocation2 + $0x2f8] sm:$0xff]
    %v159 = vld [vmem:[#allocation2 + $0x300] sm:$0xff]
    %v160 = vld [vmem:[#allocation2 + $0x308] sm:$0xff]
    %v161 = vld [vmem:[#allocation2 + $0x310] sm:$0xff]
    %v162 = vld [vmem:[#allocation2 + $0x318] sm:$0xff]
    %v163 = vld [vmem:[#allocation2 + $0x320] sm:$0xff]
    %v164 = vld [vmem:[#allocation2 + $0x328] sm:$0xff]
    %v165 = vld [vmem:[#allocation2 + $0x330] sm:$0xff]
    %v166 = vld [vmem:[#allocation2 + $0x338] sm:$0xff]
    %v167 = vld [vmem:[#allocation2 + $0x340] sm:$0xff]
    %v168 = vld [vmem:[#allocation2 + $0x348] sm:$0xff]
    %v169 = vld [vmem:[#allocation2 + $0x350] sm:$0xff]
    %v170 = vld [vmem:[#allocation2 + $0x358] sm:$0xff]
    %v171 = vld [vmem:[#allocation2 + $0x360] sm:$0xff]
    %v172 = vld [vmem:[#allocation2 + $0x368] sm:$0xff]
    %v173 = vld [vmem:[#allocation2 + $0x370] sm:$0xff]
    %v174 = vld [vmem:[#allocation2 + $0x378] sm:$0xff]
    %v175 = vld [vmem:[#allocation2 + $0x380] sm:$0xff]
    %v176 = vld [vmem:[#allocation2 + $0x388] sm:$0xff]
    %v177 = vld [vmem:[#allocation2 + $0x390] sm:$0xff]
    %v178 = vld [vmem:[#allocation2 + $0x398] sm:$0xff]
    %v179 = vld [vmem:[#allocation2 + $0x3a0] sm:$0xff]
    %v180 = vld [vmem:[#allocation2 + $0x3a8] sm:$0xff]
    %v181 = vld [vmem:[#allocation2 + $0x3b0] sm:$0xff]
    %v182 = vld [vmem:[#allocation2 + $0x3b8] sm:$0xff]
    %v183 = vld [vmem:[#allocation2 + $0x3c0] sm:$0xff]
    %v184 = vld [vmem:[#allocation2 + $0x3c8] sm:$0xff]
    %v185 = vld [vmem:[#allocation2 + $0x3d0] sm:$0xff]
    %v186 = vld [vmem:[#allocation2 + $0x3d8] sm:$0xff]
    %v187 = vld [vmem:[#allocation2 + $0x3e0] sm:$0xff]
    %v188 = vld [vmem:[#allocation2 + $0x3e8] sm:$0xff]
    %v189 = vld [vmem:[#allocation2 + $0x3f0] sm:$0xff]
    %v190 = vld [vmem:[#allocation2 + $0x3f8] sm:$0xff]
    %v191 = vld [vmem:[#allocation2 + $0x400] sm:$0xff]
    %v192 = vld [vmem:[#allocation2 + $0x408] sm:$0xff]
    %v193 = vld [vmem:[#allocation2 + $0x410] sm:$0xff]
    %v194 = vld [vmem:[#allocation2 + $0x418] sm:$0xff]
    %v195 = vld [vmem:[#allocation2 + $0x420] sm:$0xff]
    %v196 = vld [vmem:[#allocation2 + $0x428] sm:$0xff]
    %v197 = vld [vmem:[#allocation2 + $0x430] sm:$0xff]
    %v198 = vld [vmem:[#allocation2 + $0x438] sm:$0xff]
    %v199 = vld [vmem:[#allocation2 + $0x440] sm:$0xff]
    %v200 = vld [vmem:[#allocation2 + $0x448] sm:$0xff]
    %v201 = vld [vmem:[#allocation2 + $0x450] sm:$0xff]
    %v202 = vld [vmem:[#allocation2 + $0x458] sm:$0xff]
    %v203 = vld [vmem:[#allocation2 + $0x460] sm:$0xff]
    %v204 = vld [vmem:[#allocation2 + $0x468] sm:$0xff]
    %v205 = vld [vmem:[#allocation2 + $0x470] sm:$0xff]
    %v206 = vld [vmem:[#allocation2 + $0x478] sm:$0xff]
    %v207 = vld [vmem:[#allocation2 + $0x480] sm:$0xff]
    %v208 = vld [vmem:[#allocation2 + $0x488] sm:$0xff]
    %v209 = vld [vmem:[#allocation2 + $0x490] sm:$0xff]
    %v210 = vld [vmem:[#allocation2 + $0x498] sm:$0xff]
    %v211 = vld [vmem:[#allocation2 + $0x4a0] sm:$0xff]
    %v212 = vld [vmem:[#allocation2 + $0x4a8] sm:$0xff]
    %v213 = vld [vmem:[#allocation2 + $0x4b0] sm:$0xff]
    %v214 = vld [vmem:[#allocation2 + $0x4b8] sm:$0xff]
    %v215 = vld [vmem:[#allocation2 + $0x4c0] sm:$0xff]
    %v216 = vld [vmem:[#allocation2 + $0x4c8] sm:$0xff]
    %v217 = vld [vmem:[#allocation2 + $0x4d0] sm:$0xff]
    %v218 = vld [vmem:[#allocation2 + $0x4d8] sm:$0xff]
    %v219 = vld [vmem:[#allocation2 + $0x4e0] sm:$0xff]
    %v220 = vld [vmem:[#allocation2 + $0x4e8] sm:$0xff]
    %v221 = vld [vmem:[#allocation2 + $0x4f0] sm:$0xff]
    %v222 = vld [vmem:[#allocation2 + $0x4f8] sm:$0xff]
    %v223 = vld [vmem:[#allocation2 + $0x500] sm:$0xff]
    %v224 = vld [vmem:[#allocation2 + $0x508] sm:$0xff]
    %v225 = vld [vmem:[#allocation2 + $0x510] sm:$0xff]
    %v226 = vld [vmem:[#allocation2 + $0x518] sm:$0xff]
    %v227 = vld [vmem:[#allocation2 + $0x520] sm:$0xff]
    %v228 = vld [vmem:[#allocation2 + $0x528] sm:$0xff]
    %v229 = vld [vmem:[#allocation2 + $0x530] sm:$0xff]
    %v230 = vld [vmem:[#allocation2 + $0x538] sm:$0xff]
    %v231 = vld [vmem:[#allocation2 + $0x540] sm:$0xff]
    %v232 = vld [vmem:[#allocation2 + $0x548] sm:$0xff]
    %v233 = vld [vmem:[#allocation2 + $0x550] sm:$0xff]
    %v234 = vld [vmem:[#allocation2 + $0x558] sm:$0xff]
    %v235 = vld [vmem:[#allocation2 + $0x560] sm:$0xff]
    %v236 = vld [vmem:[#allocation2 + $0x568] sm:$0xff]
    %v237 = vld [vmem:[#allocation2 + $0x570] sm:$0xff]
    %v238 = vld [vmem:[#allocation2 + $0x578] sm:$0xff]
    %v239 = vld [vmem:[#allocation2 + $0x580] sm:$0xff]
    %v240 = vld [vmem:[#allocation2 + $0x588] sm:$0xff]
    %v241 = vld [vmem:[#allocation2 + $0x590] sm:$0xff]
    %v242 = vld [vmem:[#allocation2 + $0x598] sm:$0xff]
    %v243 = vld [vmem:[#allocation2 + $0x5a0] sm:$0xff]
    %v244 = vld [vmem:[#allocation2 + $0x5a8] sm:$0xff]
    %v245 = vld [vmem:[#allocation2 + $0x5b0] sm:$0xff]
    %v246 = vld [vmem:[#allocation2 + $0x5b8] sm:$0xff]
    %v247 = vld [vmem:[#allocation2 + $0x5c0] sm:$0xff]
    %v248 = vld [vmem:[#allocation2 + $0x5c8] sm:$0xff]
    %v249 = vld [vmem:[#allocation2 + $0x5d0] sm:$0xff]
    %v250 = vld [vmem:[#allocation2 + $0x5d8] sm:$0xff]
    %v251 = vld [vmem:[#allocation2 + $0x5e0] sm:$0xff]
    %v252 = vld [vmem:[#allocation2 + $0x5e8] sm:$0xff]
    %v253 = vld [vmem:[#allocation2 + $0x5f0] sm:$0xff]
    %v254 = vld [vmem:[#allocation2 + $0x5f8] sm:$0xff]
    %v255 = vld [vmem:[#allocation2 + $0x600] sm:$0xff]
    %v256 = vld [vmem:[#allocation2 + $0x608] sm:$0xff]
    %v257 = vld [vmem:[#allocation2 + $0x610] sm:$0xff]
    %v258 = vld [vmem:[#allocation2 + $0x618] sm:$0xff]
    %v259 = vld [vmem:[#allocation2 + $0x620] sm:$0xff]
    %v260 = vld [vmem:[#allocation2 + $0x628] sm:$0xff]
    %v261 = vld [vmem:[#allocation2 + $0x630] sm:$0xff]
    %v262 = vld [vmem:[#allocation2 + $0x638] sm:$0xff]
    %v263 = vld [vmem:[#allocation2 + $0x640] sm:$0xff]
    %v264 = vld [vmem:[#allocation2 + $0x648] sm:$0xff]
    %v265 = vld [vmem:[#allocation2 + $0x650] sm:$0xff]
    %v266 = vld [vmem:[#allocation2 + $0x658] sm:$0xff]
    %v267 = vld [vmem:[#allocation2 + $0x660] sm:$0xff]
    %v268 = vld [vmem:[#allocation2 + $0x668] sm:$0xff]
    %v269 = vld [vmem:[#allocation2 + $0x670] sm:$0xff]
    %v270 = vld [vmem:[#allocation2 + $0x678] sm:$0xff]
    %v271 = vld [vmem:[#allocation2 + $0x680] sm:$0xff]
    %v272 = vld [vmem:[#allocation2 + $0x688] sm:$0xff]
    %v273 = vld [vmem:[#allocation2 + $0x690] sm:$0xff]
    %v274 = vld [vmem:[#allocation2 + $0x698] sm:$0xff]
    %v275 = vld [vmem:[#allocation2 + $0x6a0] sm:$0xff]
    %v276 = vld [vmem:[#allocation2 + $0x6a8] sm:$0xff]
    %v277 = vld [vmem:[#allocation2 + $0x6b0] sm:$0xff]
    %v278 = vld [vmem:[#allocation2 + $0x6b8] sm:$0xff]
    %v279 = vld [vmem:[#allocation2 + $0x6c0] sm:$0xff]
    %v280 = vld [vmem:[#allocation2 + $0x6c8] sm:$0xff]
    %v281 = vld [vmem:[#allocation2 + $0x6d0] sm:$0xff]
    %v282 = vld [vmem:[#allocation2 + $0x6d8] sm:$0xff]
    %v283 = vld [vmem:[#allocation2 + $0x6e0] sm:$0xff]
    %v284 = vld [vmem:[#allocation2 + $0x6e8] sm:$0xff]
    %v285 = vld [vmem:[#allocation2 + $0x6f0] sm:$0xff]
    %v286 = vld [vmem:[#allocation2 + $0x6f8] sm:$0xff]
    %v287 = vld [vmem:[%s2] sm:$0xf]
    %v289 = vlaneseq
    %v290 = vshrl.u32 %v289, 7
    %v291 = vsub.s32 0, %v290
    %v292 = vrot.slane %v287, %v291
    %v293 = vlaneseq
    %v294 = vshrl.u32 %v293, 7
    %v295 = vsub.s32 1, %v294
    %v296 = vrot.slane %v287, %v295
    %v297 = vlaneseq
    %v298 = vshrl.u32 %v297, 7
    %v299 = vsub.s32 2, %v298
    %v300 = vrot.slane %v287, %v299
    %v301 = vlaneseq
    %v302 = vshrl.u32 %v301, 7
    %v303 = vsub.s32 3, %v302
    %v304 = vrot.slane %v287, %v303
    %v317 = vunpack.c.l.b16 %v55
    %v318 = vunpack.c.h.b16 %v55
    %v319 = vunpack.c.l.b16 %v56
    %v320 = vunpack.c.h.b16 %v56
    %v321 = vunpack.c.l.b16 %v57
    %v322 = vunpack.c.h.b16 %v57
    %v323 = vunpack.c.l.b16 %v58
    %v324 = vunpack.c.l.b16 %v59
    %v325 = vunpack.c.h.b16 %v59
    %v326 = vunpack.c.l.b16 %v60
    %v327 = vunpack.c.h.b16 %v60
    %v328 = vunpack.c.l.b16 %v61
    %v329 = vunpack.c.h.b16 %v61
    %v330 = vunpack.c.l.b16 %v62
    %v331 = vpack.c.b16 %v324, %v317
    %v332 = vpack.c.b16 %v325, %v318
    %v333 = vpack.c.b16 %v326, %v319
    %v334 = vpack.c.b16 %v327, %v320
    %v335 = vpack.c.b16 %v328, %v321
    %v336 = vpack.c.b16 %v329, %v322
    %v337 = vpack.c.b16 %v330, %v323
    %v569 = vunpack.c.l.b16 %v63
    %v570 = vunpack.c.h.b16 %v63
    %v571 = vunpack.c.l.b16 %v64
    %v572 = vunpack.c.h.b16 %v64
    %v573 = vunpack.c.l.b16 %v65
    %v574 = vunpack.c.h.b16 %v65
    %v575 = vunpack.c.l.b16 %v66
    %v576 = vunpack.c.h.b16 %v66
    %v577 = vunpack.c.l.b16 %v67
    %v578 = vunpack.c.h.b16 %v67
    %v579 = vunpack.c.l.b16 %v68
    %v580 = vunpack.c.h.b16 %v68
    %v581 = vunpack.c.l.b16 %v69
    %v582 = vunpack.c.h.b16 %v69
    %v583 = vunpack.c.l.b16 %v70
    %v584 = vunpack.c.h.b16 %v70
    %v585 = vunpack.c.l.b16 %v71
    %v586 = vunpack.c.h.b16 %v71
    %v587 = vunpack.c.l.b16 %v72
    %v588 = vunpack.c.h.b16 %v72
    %v589 = vunpack.c.l.b16 %v73
    %v590 = vunpack.c.h.b16 %v73
    %v591 = vunpack.c.l.b16 %v74
    %v592 = vunpack.c.h.b16 %v74
    %v593 = vunpack.c.l.b16 %v75
    %v594 = vunpack.c.h.b16 %v75
    %v595 = vunpack.c.l.b16 %v76
    %v596 = vunpack.c.h.b16 %v76
    %v597 = vunpack.c.l.b16 %v77
    %v598 = vunpack.c.h.b16 %v77
    %v599 = vunpack.c.l.b16 %v78
    %v600 = vunpack.c.h.b16 %v78
    %v601 = vunpack.c.l.b16 %v79
    %v602 = vunpack.c.h.b16 %v79
    %v603 = vunpack.c.l.b16 %v80
    %v604 = vunpack.c.h.b16 %v80
    %v605 = vunpack.c.l.b16 %v81
    %v606 = vunpack.c.h.b16 %v81
    %v607 = vunpack.c.l.b16 %v82
    %v608 = vunpack.c.h.b16 %v82
    %v609 = vunpack.c.l.b16 %v83
    %v610 = vunpack.c.h.b16 %v83
    %v611 = vunpack.c.l.b16 %v84
    %v612 = vunpack.c.h.b16 %v84
    %v613 = vunpack.c.l.b16 %v85
    %v614 = vunpack.c.h.b16 %v85
    %v615 = vunpack.c.l.b16 %v86
    %v616 = vunpack.c.h.b16 %v86
    %v617 = vunpack.c.l.b16 %v87
    %v618 = vunpack.c.h.b16 %v87
    %v619 = vunpack.c.l.b16 %v88
    %v620 = vunpack.c.h.b16 %v88
    %v621 = vunpack.c.l.b16 %v89
    %v622 = vunpack.c.h.b16 %v89
    %v623 = vunpack.c.l.b16 %v90
    %v624 = vunpack.c.h.b16 %v90
    %v625 = vunpack.c.l.b16 %v91
    %v626 = vunpack.c.h.b16 %v91
    %v627 = vunpack.c.l.b16 %v92
    %v628 = vunpack.c.h.b16 %v92
    %v629 = vunpack.c.l.b16 %v93
    %v630 = vunpack.c.h.b16 %v93
    %v631 = vunpack.c.l.b16 %v94
    %v632 = vunpack.c.h.b16 %v94
    %v633 = vunpack.c.l.b16 %v95
    %v634 = vunpack.c.h.b16 %v95
    %v635 = vunpack.c.l.b16 %v96
    %v636 = vunpack.c.h.b16 %v96
    %v637 = vunpack.c.l.b16 %v97
    %v638 = vunpack.c.h.b16 %v97
    %v639 = vunpack.c.l.b16 %v98
    %v640 = vunpack.c.h.b16 %v98
    %v641 = vunpack.c.l.b16 %v99
    %v642 = vunpack.c.h.b16 %v99
    %v643 = vunpack.c.l.b16 %v100
    %v644 = vunpack.c.h.b16 %v100
    %v645 = vunpack.c.l.b16 %v101
    %v646 = vunpack.c.h.b16 %v101
    %v647 = vunpack.c.l.b16 %v102
    %v648 = vunpack.c.h.b16 %v102
    %v649 = vunpack.c.l.b16 %v103
    %v650 = vunpack.c.h.b16 %v103
    %v651 = vunpack.c.l.b16 %v104
    %v652 = vunpack.c.h.b16 %v104
    %v653 = vunpack.c.l.b16 %v105
    %v654 = vunpack.c.h.b16 %v105
    %v655 = vunpack.c.l.b16 %v106
    %v656 = vunpack.c.h.b16 %v106
    %v657 = vunpack.c.l.b16 %v107
    %v658 = vunpack.c.h.b16 %v107
    %v659 = vunpack.c.l.b16 %v108
    %v660 = vunpack.c.h.b16 %v108
    %v661 = vunpack.c.l.b16 %v109
    %v662 = vunpack.c.h.b16 %v109
    %v663 = vunpack.c.l.b16 %v110
    %v664 = vunpack.c.h.b16 %v110
    %v665 = vunpack.c.l.b16 %v111
    %v666 = vunpack.c.h.b16 %v111
    %v667 = vunpack.c.l.b16 %v112
    %v668 = vunpack.c.h.b16 %v112
    %v669 = vunpack.c.l.b16 %v113
    %v670 = vunpack.c.h.b16 %v113
    %v671 = vunpack.c.l.b16 %v114
    %v672 = vunpack.c.h.b16 %v114
    %v673 = vunpack.c.l.b16 %v115
    %v674 = vunpack.c.h.b16 %v115
    %v675 = vunpack.c.l.b16 %v116
    %v676 = vunpack.c.h.b16 %v116
    %v677 = vunpack.c.l.b16 %v117
    %v678 = vunpack.c.h.b16 %v117
    %v679 = vunpack.c.l.b16 %v118
    %v680 = vunpack.c.h.b16 %v118
    %v681 = vunpack.c.l.b16 %v119
    %v682 = vunpack.c.h.b16 %v119
    %v683 = vunpack.c.l.b16 %v120
    %v684 = vunpack.c.h.b16 %v120
    %v685 = vunpack.c.l.b16 %v121
    %v686 = vunpack.c.h.b16 %v121
    %v687 = vunpack.c.l.b16 %v122
    %v688 = vunpack.c.h.b16 %v122
    %v689 = vunpack.c.l.b16 %v123
    %v690 = vunpack.c.h.b16 %v123
    %v691 = vunpack.c.l.b16 %v124
    %v692 = vunpack.c.h.b16 %v124
    %v693 = vunpack.c.l.b16 %v125
    %v694 = vunpack.c.h.b16 %v125
    %v695 = vunpack.c.l.b16 %v126
    %v696 = vunpack.c.h.b16 %v126
    %v697 = vunpack.c.l.b16 %v127
    %v698 = vunpack.c.h.b16 %v127
    %v699 = vunpack.c.l.b16 %v128
    %v700 = vunpack.c.h.b16 %v128
    %v701 = vunpack.c.l.b16 %v129
    %v702 = vunpack.c.h.b16 %v129
    %v703 = vunpack.c.l.b16 %v130
    %v704 = vunpack.c.h.b16 %v130
    %v705 = vunpack.c.l.b16 %v131
    %v706 = vunpack.c.h.b16 %v131
    %v707 = vunpack.c.l.b16 %v132
    %v708 = vunpack.c.h.b16 %v132
    %v709 = vunpack.c.l.b16 %v133
    %v710 = vunpack.c.h.b16 %v133
    %v711 = vunpack.c.l.b16 %v134
    %v712 = vunpack.c.h.b16 %v134
    %v713 = vunpack.c.l.b16 %v135
    %v714 = vunpack.c.h.b16 %v135
    %v715 = vunpack.c.l.b16 %v136
    %v716 = vunpack.c.h.b16 %v136
    %v717 = vunpack.c.l.b16 %v137
    %v718 = vunpack.c.h.b16 %v137
    %v719 = vunpack.c.l.b16 %v138
    %v720 = vunpack.c.h.b16 %v138
    %v721 = vunpack.c.l.b16 %v139
    %v722 = vunpack.c.h.b16 %v139
    %v723 = vunpack.c.l.b16 %v140
    %v724 = vunpack.c.h.b16 %v140
    %v725 = vunpack.c.l.b16 %v141
    %v726 = vunpack.c.h.b16 %v141
    %v727 = vunpack.c.l.b16 %v142
    %v728 = vunpack.c.h.b16 %v142
    %v729 = vunpack.c.l.b16 %v143
    %v730 = vunpack.c.h.b16 %v143
    %v731 = vunpack.c.l.b16 %v144
    %v732 = vunpack.c.h.b16 %v144
    %v733 = vunpack.c.l.b16 %v145
    %v734 = vunpack.c.h.b16 %v145
    %v735 = vunpack.c.l.b16 %v146
    %v736 = vunpack.c.h.b16 %v146
    %v737 = vunpack.c.l.b16 %v147
    %v738 = vunpack.c.h.b16 %v147
    %v739 = vunpack.c.l.b16 %v148
    %v740 = vunpack.c.h.b16 %v148
    %v741 = vunpack.c.l.b16 %v149
    %v742 = vunpack.c.h.b16 %v149
    %v743 = vunpack.c.l.b16 %v150
    %v744 = vunpack.c.h.b16 %v150
    %v745 = vunpack.c.l.b16 %v151
    %v746 = vunpack.c.h.b16 %v151
    %v747 = vunpack.c.l.b16 %v152
    %v748 = vunpack.c.h.b16 %v152
    %v749 = vunpack.c.l.b16 %v153
    %v750 = vunpack.c.h.b16 %v153
    %v751 = vunpack.c.l.b16 %v154
    %v752 = vunpack.c.h.b16 %v154
    %v753 = vunpack.c.l.b16 %v155
    %v754 = vunpack.c.h.b16 %v155
    %v755 = vunpack.c.l.b16 %v156
    %v756 = vunpack.c.h.b16 %v156
    %v757 = vunpack.c.l.b16 %v157
    %v758 = vunpack.c.h.b16 %v157
    %v759 = vunpack.c.l.b16 %v158
    %v760 = vunpack.c.h.b16 %v158
    %v761 = vunpack.c.l.b16 %v159
    %v762 = vunpack.c.h.b16 %v159
    %v763 = vunpack.c.l.b16 %v160
    %v764 = vunpack.c.h.b16 %v160
    %v765 = vunpack.c.l.b16 %v161
    %v766 = vunpack.c.h.b16 %v161
    %v767 = vunpack.c.l.b16 %v162
    %v768 = vunpack.c.h.b16 %v162
    %v769 = vunpack.c.l.b16 %v163
    %v770 = vunpack.c.h.b16 %v163
    %v771 = vunpack.c.l.b16 %v164
    %v772 = vunpack.c.h.b16 %v164
    %v773 = vunpack.c.l.b16 %v165
    %v774 = vunpack.c.h.b16 %v165
    %v775 = vunpack.c.l.b16 %v166
    %v776 = vunpack.c.h.b16 %v166
    %v777 = vunpack.c.l.b16 %v167
    %v778 = vunpack.c.h.b16 %v167
    %v779 = vunpack.c.l.b16 %v168
    %v780 = vunpack.c.h.b16 %v168
    %v781 = vunpack.c.l.b16 %v169
    %v782 = vunpack.c.h.b16 %v169
    %v783 = vunpack.c.l.b16 %v170
    %v784 = vunpack.c.h.b16 %v170
    %v785 = vunpack.c.l.b16 %v171
    %v786 = vunpack.c.h.b16 %v171
    %v787 = vunpack.c.l.b16 %v172
    %v788 = vunpack.c.h.b16 %v172
    %v789 = vunpack.c.l.b16 %v173
    %v790 = vunpack.c.h.b16 %v173
    %v791 = vunpack.c.l.b16 %v174
    %v792 = vunpack.c.h.b16 %v174
    %v793 = vunpack.c.l.b16 %v175
    %v794 = vunpack.c.h.b16 %v175
    %v795 = vunpack.c.l.b16 %v176
    %v796 = vunpack.c.h.b16 %v176
    %v797 = vunpack.c.l.b16 %v177
    %v798 = vunpack.c.h.b16 %v177
    %v799 = vunpack.c.l.b16 %v178
    %v800 = vunpack.c.h.b16 %v178
    %v801 = vunpack.c.l.b16 %v179
    %v802 = vunpack.c.h.b16 %v179
    %v803 = vunpack.c.l.b16 %v180
    %v804 = vunpack.c.h.b16 %v180
    %v805 = vunpack.c.l.b16 %v181
    %v806 = vunpack.c.h.b16 %v181
    %v807 = vunpack.c.l.b16 %v182
    %v808 = vunpack.c.h.b16 %v182
    %v809 = vunpack.c.l.b16 %v183
    %v810 = vunpack.c.h.b16 %v183
    %v811 = vunpack.c.l.b16 %v184
    %v812 = vunpack.c.h.b16 %v184
    %v813 = vunpack.c.l.b16 %v185
    %v814 = vunpack.c.h.b16 %v185
    %v815 = vunpack.c.l.b16 %v186
    %v816 = vunpack.c.h.b16 %v186
    %v817 = vunpack.c.l.b16 %v187
    %v818 = vunpack.c.h.b16 %v187
    %v819 = vunpack.c.l.b16 %v188
    %v820 = vunpack.c.h.b16 %v188
    %v821 = vunpack.c.l.b16 %v189
    %v822 = vunpack.c.h.b16 %v189
    %v823 = vunpack.c.l.b16 %v190
    %v824 = vunpack.c.h.b16 %v190
    %v825 = vunpack.c.l.b16 %v191
    %v826 = vunpack.c.h.b16 %v191
    %v827 = vunpack.c.l.b16 %v192
    %v828 = vunpack.c.h.b16 %v192
    %v829 = vunpack.c.l.b16 %v193
    %v830 = vunpack.c.h.b16 %v193
    %v831 = vunpack.c.l.b16 %v194
    %v832 = vunpack.c.h.b16 %v194
    %v833 = vunpack.c.l.b16 %v195
    %v834 = vunpack.c.h.b16 %v195
    %v835 = vunpack.c.l.b16 %v196
    %v836 = vunpack.c.h.b16 %v196
    %v837 = vunpack.c.l.b16 %v197
    %v838 = vunpack.c.h.b16 %v197
    %v839 = vunpack.c.l.b16 %v198
    %v840 = vunpack.c.h.b16 %v198
    %v841 = vunpack.c.l.b16 %v199
    %v842 = vunpack.c.h.b16 %v199
    %v843 = vunpack.c.l.b16 %v200
    %v844 = vunpack.c.h.b16 %v200
    %v845 = vunpack.c.l.b16 %v201
    %v846 = vunpack.c.h.b16 %v201
    %v847 = vunpack.c.l.b16 %v202
    %v848 = vunpack.c.h.b16 %v202
    %v849 = vunpack.c.l.b16 %v203
    %v850 = vunpack.c.h.b16 %v203
    %v851 = vunpack.c.l.b16 %v204
    %v852 = vunpack.c.h.b16 %v204
    %v853 = vunpack.c.l.b16 %v205
    %v854 = vunpack.c.h.b16 %v205
    %v855 = vunpack.c.l.b16 %v206
    %v856 = vunpack.c.h.b16 %v206
    %v857 = vunpack.c.l.b16 %v207
    %v858 = vunpack.c.h.b16 %v207
    %v859 = vunpack.c.l.b16 %v208
    %v860 = vunpack.c.h.b16 %v208
    %v861 = vunpack.c.l.b16 %v209
    %v862 = vunpack.c.h.b16 %v209
    %v863 = vunpack.c.l.b16 %v210
    %v864 = vunpack.c.h.b16 %v210
    %v865 = vunpack.c.l.b16 %v211
    %v866 = vunpack.c.h.b16 %v211
    %v867 = vunpack.c.l.b16 %v212
    %v868 = vunpack.c.h.b16 %v212
    %v869 = vunpack.c.l.b16 %v213
    %v870 = vunpack.c.h.b16 %v213
    %v871 = vunpack.c.l.b16 %v214
    %v872 = vunpack.c.h.b16 %v214
    %v873 = vunpack.c.l.b16 %v215
    %v874 = vunpack.c.h.b16 %v215
    %v875 = vunpack.c.l.b16 %v216
    %v876 = vunpack.c.h.b16 %v216
    %v877 = vunpack.c.l.b16 %v217
    %v878 = vunpack.c.h.b16 %v217
    %v879 = vunpack.c.l.b16 %v218
    %v880 = vunpack.c.h.b16 %v218
    %v881 = vunpack.c.l.b16 %v219
    %v882 = vunpack.c.h.b16 %v219
    %v883 = vunpack.c.l.b16 %v220
    %v884 = vunpack.c.h.b16 %v220
    %v885 = vunpack.c.l.b16 %v221
    %v886 = vunpack.c.h.b16 %v221
    %v887 = vunpack.c.l.b16 %v222
    %v888 = vunpack.c.h.b16 %v222
    %v889 = vunpack.c.l.b16 %v223
    %v890 = vunpack.c.h.b16 %v223
    %v891 = vunpack.c.l.b16 %v224
    %v892 = vunpack.c.h.b16 %v224
    %v893 = vunpack.c.l.b16 %v225
    %v894 = vunpack.c.h.b16 %v225
    %v895 = vunpack.c.l.b16 %v226
    %v896 = vunpack.c.h.b16 %v226
    %v897 = vunpack.c.l.b16 %v227
    %v898 = vunpack.c.h.b16 %v227
    %v899 = vunpack.c.l.b16 %v228
    %v900 = vunpack.c.h.b16 %v228
    %v901 = vunpack.c.l.b16 %v229
    %v902 = vunpack.c.h.b16 %v229
    %v903 = vunpack.c.l.b16 %v230
    %v904 = vunpack.c.h.b16 %v230
    %v905 = vunpack.c.l.b16 %v231
    %v906 = vunpack.c.h.b16 %v231
    %v907 = vunpack.c.l.b16 %v232
    %v908 = vunpack.c.h.b16 %v232
    %v909 = vunpack.c.l.b16 %v233
    %v910 = vunpack.c.h.b16 %v233
    %v911 = vunpack.c.l.b16 %v234
    %v912 = vunpack.c.h.b16 %v234
    %v913 = vunpack.c.l.b16 %v235
    %v914 = vunpack.c.h.b16 %v235
    %v915 = vunpack.c.l.b16 %v236
    %v916 = vunpack.c.h.b16 %v236
    %v917 = vunpack.c.l.b16 %v237
    %v918 = vunpack.c.h.b16 %v237
    %v919 = vunpack.c.l.b16 %v238
    %v920 = vunpack.c.h.b16 %v238
    %v921 = vunpack.c.l.b16 %v239
    %v922 = vunpack.c.h.b16 %v239
    %v923 = vunpack.c.l.b16 %v240
    %v924 = vunpack.c.h.b16 %v240
    %v925 = vunpack.c.l.b16 %v241
    %v926 = vunpack.c.h.b16 %v241
    %v927 = vunpack.c.l.b16 %v242
    %v928 = vunpack.c.h.b16 %v242
    %v929 = vunpack.c.l.b16 %v243
    %v930 = vunpack.c.h.b16 %v243
    %v931 = vunpack.c.l.b16 %v244
    %v932 = vunpack.c.h.b16 %v244
    %v933 = vunpack.c.l.b16 %v245
    %v934 = vunpack.c.h.b16 %v245
    %v935 = vunpack.c.l.b16 %v246
    %v936 = vunpack.c.h.b16 %v246
    %v937 = vunpack.c.l.b16 %v247
    %v938 = vunpack.c.h.b16 %v247
    %v939 = vunpack.c.l.b16 %v248
    %v940 = vunpack.c.h.b16 %v248
    %v941 = vunpack.c.l.b16 %v249
    %v942 = vunpack.c.h.b16 %v249
    %v943 = vunpack.c.l.b16 %v250
    %v944 = vunpack.c.h.b16 %v250
    %v945 = vunpack.c.l.b16 %v251
    %v946 = vunpack.c.h.b16 %v251
    %v947 = vunpack.c.l.b16 %v252
    %v948 = vunpack.c.h.b16 %v252
    %v949 = vunpack.c.l.b16 %v253
    %v950 = vunpack.c.h.b16 %v253
    %v951 = vunpack.c.l.b16 %v254
    %v952 = vunpack.c.h.b16 %v254
    %v953 = vunpack.c.l.b16 %v255
    %v954 = vunpack.c.h.b16 %v255
    %v955 = vunpack.c.l.b16 %v256
    %v956 = vunpack.c.h.b16 %v256
    %v957 = vunpack.c.l.b16 %v257
    %v958 = vunpack.c.h.b16 %v257
    %v959 = vunpack.c.l.b16 %v258
    %v960 = vunpack.c.h.b16 %v258
    %v961 = vunpack.c.l.b16 %v259
    %v962 = vunpack.c.h.b16 %v259
    %v963 = vunpack.c.l.b16 %v260
    %v964 = vunpack.c.h.b16 %v260
    %v965 = vunpack.c.l.b16 %v261
    %v966 = vunpack.c.h.b16 %v261
    %v967 = vunpack.c.l.b16 %v262
    %v968 = vunpack.c.h.b16 %v262
    %v969 = vunpack.c.l.b16 %v263
    %v970 = vunpack.c.h.b16 %v263
    %v971 = vunpack.c.l.b16 %v264
    %v972 = vunpack.c.h.b16 %v264
    %v973 = vunpack.c.l.b16 %v265
    %v974 = vunpack.c.h.b16 %v265
    %v975 = vunpack.c.l.b16 %v266
    %v976 = vunpack.c.h.b16 %v266
    %v977 = vunpack.c.l.b16 %v267
    %v978 = vunpack.c.h.b16 %v267
    %v979 = vunpack.c.l.b16 %v268
    %v980 = vunpack.c.h.b16 %v268
    %v981 = vunpack.c.l.b16 %v269
    %v982 = vunpack.c.h.b16 %v269
    %v983 = vunpack.c.l.b16 %v270
    %v984 = vunpack.c.h.b16 %v270
    %v985 = vunpack.c.l.b16 %v271
    %v986 = vunpack.c.h.b16 %v271
    %v987 = vunpack.c.l.b16 %v272
    %v988 = vunpack.c.h.b16 %v272
    %v989 = vunpack.c.l.b16 %v273
    %v990 = vunpack.c.h.b16 %v273
    %v991 = vunpack.c.l.b16 %v274
    %v992 = vunpack.c.h.b16 %v274
    %v993 = vunpack.c.l.b16 %v275
    %v994 = vunpack.c.h.b16 %v275
    %v995 = vunpack.c.l.b16 %v276
    %v996 = vunpack.c.h.b16 %v276
    %v997 = vunpack.c.l.b16 %v277
    %v998 = vunpack.c.h.b16 %v277
    %v999 = vunpack.c.l.b16 %v278
    %v1000 = vunpack.c.h.b16 %v278
    %v1001 = vunpack.c.l.b16 %v279
    %v1002 = vunpack.c.h.b16 %v279
    %v1003 = vunpack.c.l.b16 %v280
    %v1004 = vunpack.c.h.b16 %v280
    %v1005 = vunpack.c.l.b16 %v281
    %v1006 = vunpack.c.h.b16 %v281
    %v1007 = vunpack.c.l.b16 %v282
    %v1008 = vunpack.c.h.b16 %v282
    %v1009 = vunpack.c.l.b16 %v283
    %v1010 = vunpack.c.h.b16 %v283
    %v1011 = vunpack.c.l.b16 %v284
    %v1012 = vunpack.c.h.b16 %v284
    %v1013 = vunpack.c.l.b16 %v285
    %v1014 = vunpack.c.h.b16 %v285
    %v1015 = vunpack.c.l.b16 %v286
    %v1016 = vunpack.c.h.b16 %v286
    %v1017 = vpack.c.b16 %v573, %v569
    %v1018 = vpack.c.b16 %v574, %v570
    %v1019 = vpack.c.b16 %v575, %v571
    %v1020 = vpack.c.b16 %v576, %v572
    %v1021 = vpack.c.b16 %v581, %v577
    %v1022 = vpack.c.b16 %v582, %v578
    %v1023 = vpack.c.b16 %v583, %v579
    %v1024 = vpack.c.b16 %v584, %v580
    %v1025 = vpack.c.b16 %v589, %v585
    %v1026 = vpack.c.b16 %v590, %v586
    %v1027 = vpack.c.b16 %v591, %v587
    %v1028 = vpack.c.b16 %v592, %v588
    %v1029 = vpack.c.b16 %v597, %v593
    %v1030 = vpack.c.b16 %v598, %v594
    %v1031 = vpack.c.b16 %v599, %v595
    %v1032 = vpack.c.b16 %v600, %v596
    %v1033 = vpack.c.b16 %v605, %v601
    %v1034 = vpack.c.b16 %v606, %v602
    %v1035 = vpack.c.b16 %v607, %v603
    %v1036 = vpack.c.b16 %v608, %v604
    %v1037 = vpack.c.b16 %v613, %v609
    %v1038 = vpack.c.b16 %v614, %v610
    %v1039 = vpack.c.b16 %v615, %v611
    %v1040 = vpack.c.b16 %v616, %v612
    %v1041 = vpack.c.b16 %v621, %v617
    %v1042 = vpack.c.b16 %v622, %v618
    %v1043 = vpack.c.b16 %v623, %v619
    %v1044 = vpack.c.b16 %v624, %v620
    %v1045 = vpack.c.b16 %v629, %v625
    %v1046 = vpack.c.b16 %v630, %v626
    %v1047 = vpack.c.b16 %v631, %v627
    %v1048 = vpack.c.b16 %v632, %v628
    %v1049 = vpack.c.b16 %v637, %v633
    %v1050 = vpack.c.b16 %v638, %v634
    %v1051 = vpack.c.b16 %v639, %v635
    %v1052 = vpack.c.b16 %v640, %v636
    %v1053 = vpack.c.b16 %v645, %v641
    %v1054 = vpack.c.b16 %v646, %v642
    %v1055 = vpack.c.b16 %v647, %v643
    %v1056 = vpack.c.b16 %v648, %v644
    %v1057 = vpack.c.b16 %v653, %v649
    %v1058 = vpack.c.b16 %v654, %v650
    %v1059 = vpack.c.b16 %v655, %v651
    %v1060 = vpack.c.b16 %v656, %v652
    %v1061 = vpack.c.b16 %v661, %v657
    %v1062 = vpack.c.b16 %v662, %v658
    %v1063 = vpack.c.b16 %v663, %v659
    %v1064 = vpack.c.b16 %v664, %v660
    %v1065 = vpack.c.b16 %v669, %v665
    %v1066 = vpack.c.b16 %v670, %v666
    %v1067 = vpack.c.b16 %v671, %v667
    %v1068 = vpack.c.b16 %v672, %v668
    %v1069 = vpack.c.b16 %v677, %v673
    %v1070 = vpack.c.b16 %v678, %v674
    %v1071 = vpack.c.b16 %v679, %v675
    %v1072 = vpack.c.b16 %v680, %v676
    %v1073 = vpack.c.b16 %v685, %v681
    %v1074 = vpack.c.b16 %v686, %v682
    %v1075 = vpack.c.b16 %v687, %v683
    %v1076 = vpack.c.b16 %v688, %v684
    %v1077 = vpack.c.b16 %v693, %v689
    %v1078 = vpack.c.b16 %v694, %v690
    %v1079 = vpack.c.b16 %v695, %v691
    %v1080 = vpack.c.b16 %v696, %v692
    %v1081 = vpack.c.b16 %v701, %v697
    %v1082 = vpack.c.b16 %v702, %v698
    %v1083 = vpack.c.b16 %v703, %v699
    %v1084 = vpack.c.b16 %v704, %v700
    %v1085 = vpack.c.b16 %v709, %v705
    %v1086 = vpack.c.b16 %v710, %v706
    %v1087 = vpack.c.b16 %v711, %v707
    %v1088 = vpack.c.b16 %v712, %v708
    %v1089 = vpack.c.b16 %v717, %v713
    %v1090 = vpack.c.b16 %v718, %v714
    %v1091 = vpack.c.b16 %v719, %v715
    %v1092 = vpack.c.b16 %v720, %v716
    %v1093 = vpack.c.b16 %v725, %v721
    %v1094 = vpack.c.b16 %v726, %v722
    %v1095 = vpack.c.b16 %v727, %v723
    %v1096 = vpack.c.b16 %v728, %v724
    %v1097 = vpack.c.b16 %v733, %v729
    %v1098 = vpack.c.b16 %v734, %v730
    %v1099 = vpack.c.b16 %v735, %v731
    %v1100 = vpack.c.b16 %v736, %v732
    %v1101 = vpack.c.b16 %v741, %v737
    %v1102 = vpack.c.b16 %v742, %v738
    %v1103 = vpack.c.b16 %v743, %v739
    %v1104 = vpack.c.b16 %v744, %v740
    %v1105 = vpack.c.b16 %v749, %v745
    %v1106 = vpack.c.b16 %v750, %v746
    %v1107 = vpack.c.b16 %v751, %v747
    %v1108 = vpack.c.b16 %v752, %v748
    %v1109 = vpack.c.b16 %v757, %v753
    %v1110 = vpack.c.b16 %v758, %v754
    %v1111 = vpack.c.b16 %v759, %v755
    %v1112 = vpack.c.b16 %v760, %v756
    %v1113 = vpack.c.b16 %v765, %v761
    %v1114 = vpack.c.b16 %v766, %v762
    %v1115 = vpack.c.b16 %v767, %v763
    %v1116 = vpack.c.b16 %v768, %v764
    %v1117 = vpack.c.b16 %v773, %v769
    %v1118 = vpack.c.b16 %v774, %v770
    %v1119 = vpack.c.b16 %v775, %v771
    %v1120 = vpack.c.b16 %v776, %v772
    %v1121 = vpack.c.b16 %v781, %v777
    %v1122 = vpack.c.b16 %v782, %v778
    %v1123 = vpack.c.b16 %v783, %v779
    %v1124 = vpack.c.b16 %v784, %v780
    %v1125 = vpack.c.b16 %v789, %v785
    %v1126 = vpack.c.b16 %v790, %v786
    %v1127 = vpack.c.b16 %v791, %v787
    %v1128 = vpack.c.b16 %v792, %v788
    %v1129 = vpack.c.b16 %v797, %v793
    %v1130 = vpack.c.b16 %v798, %v794
    %v1131 = vpack.c.b16 %v799, %v795
    %v1132 = vpack.c.b16 %v800, %v796
    %v1133 = vpack.c.b16 %v805, %v801
    %v1134 = vpack.c.b16 %v806, %v802
    %v1135 = vpack.c.b16 %v807, %v803
    %v1136 = vpack.c.b16 %v808, %v804
    %v1137 = vpack.c.b16 %v813, %v809
    %v1138 = vpack.c.b16 %v814, %v810
    %v1139 = vpack.c.b16 %v815, %v811
    %v1140 = vpack.c.b16 %v816, %v812
    %v1141 = vpack.c.b16 %v821, %v817
    %v1142 = vpack.c.b16 %v822, %v818
    %v1143 = vpack.c.b16 %v823, %v819
    %v1144 = vpack.c.b16 %v824, %v820
    %v1145 = vpack.c.b16 %v829, %v825
    %v1146 = vpack.c.b16 %v830, %v826
    %v1147 = vpack.c.b16 %v831, %v827
    %v1148 = vpack.c.b16 %v832, %v828
    %v1149 = vpack.c.b16 %v837, %v833
    %v1150 = vpack.c.b16 %v838, %v834
    %v1151 = vpack.c.b16 %v839, %v835
    %v1152 = vpack.c.b16 %v840, %v836
    %v1153 = vpack.c.b16 %v845, %v841
    %v1154 = vpack.c.b16 %v846, %v842
    %v1155 = vpack.c.b16 %v847, %v843
    %v1156 = vpack.c.b16 %v848, %v844
    %v1157 = vpack.c.b16 %v853, %v849
    %v1158 = vpack.c.b16 %v854, %v850
    %v1159 = vpack.c.b16 %v855, %v851
    %v1160 = vpack.c.b16 %v856, %v852
    %v1161 = vpack.c.b16 %v861, %v857
    %v1162 = vpack.c.b16 %v862, %v858
    %v1163 = vpack.c.b16 %v863, %v859
    %v1164 = vpack.c.b16 %v864, %v860
    %v1165 = vpack.c.b16 %v869, %v865
    %v1166 = vpack.c.b16 %v870, %v866
    %v1167 = vpack.c.b16 %v871, %v867
    %v1168 = vpack.c.b16 %v872, %v868
    %v1169 = vpack.c.b16 %v877, %v873
    %v1170 = vpack.c.b16 %v878, %v874
    %v1171 = vpack.c.b16 %v879, %v875
    %v1172 = vpack.c.b16 %v880, %v876
    %v1173 = vpack.c.b16 %v885, %v881
    %v1174 = vpack.c.b16 %v886, %v882
    %v1175 = vpack.c.b16 %v887, %v883
    %v1176 = vpack.c.b16 %v888, %v884
    %v1177 = vpack.c.b16 %v893, %v889
    %v1178 = vpack.c.b16 %v894, %v890
    %v1179 = vpack.c.b16 %v895, %v891
    %v1180 = vpack.c.b16 %v896, %v892
    %v1181 = vpack.c.b16 %v901, %v897
    %v1182 = vpack.c.b16 %v902, %v898
    %v1183 = vpack.c.b16 %v903, %v899
    %v1184 = vpack.c.b16 %v904, %v900
    %v1185 = vpack.c.b16 %v909, %v905
    %v1186 = vpack.c.b16 %v910, %v906
    %v1187 = vpack.c.b16 %v911, %v907
    %v1188 = vpack.c.b16 %v912, %v908
    %v1189 = vpack.c.b16 %v917, %v913
    %v1190 = vpack.c.b16 %v918, %v914
    %v1191 = vpack.c.b16 %v919, %v915
    %v1192 = vpack.c.b16 %v920, %v916
    %v1193 = vpack.c.b16 %v925, %v921
    %v1194 = vpack.c.b16 %v926, %v922
    %v1195 = vpack.c.b16 %v927, %v923
    %v1196 = vpack.c.b16 %v928, %v924
    %v1197 = vpack.c.b16 %v933, %v929
    %v1198 = vpack.c.b16 %v934, %v930
    %v1199 = vpack.c.b16 %v935, %v931
    %v1200 = vpack.c.b16 %v936, %v932
    %v1201 = vpack.c.b16 %v941, %v937
    %v1202 = vpack.c.b16 %v942, %v938
    %v1203 = vpack.c.b16 %v943, %v939
    %v1204 = vpack.c.b16 %v944, %v940
    %v1205 = vpack.c.b16 %v949, %v945
    %v1206 = vpack.c.b16 %v950, %v946
    %v1207 = vpack.c.b16 %v951, %v947
    %v1208 = vpack.c.b16 %v952, %v948
    %v1209 = vpack.c.b16 %v957, %v953
    %v1210 = vpack.c.b16 %v958, %v954
    %v1211 = vpack.c.b16 %v959, %v955
    %v1212 = vpack.c.b16 %v960, %v956
    %v1213 = vpack.c.b16 %v965, %v961
    %v1214 = vpack.c.b16 %v966, %v962
    %v1215 = vpack.c.b16 %v967, %v963
    %v1216 = vpack.c.b16 %v968, %v964
    %v1217 = vpack.c.b16 %v973, %v969
    %v1218 = vpack.c.b16 %v974, %v970
    %v1219 = vpack.c.b16 %v975, %v971
    %v1220 = vpack.c.b16 %v976, %v972
    %v1221 = vpack.c.b16 %v981, %v977
    %v1222 = vpack.c.b16 %v982, %v978
    %v1223 = vpack.c.b16 %v983, %v979
    %v1224 = vpack.c.b16 %v984, %v980
    %v1225 = vpack.c.b16 %v989, %v985
    %v1226 = vpack.c.b16 %v990, %v986
    %v1227 = vpack.c.b16 %v991, %v987
    %v1228 = vpack.c.b16 %v992, %v988
    %v1229 = vpack.c.b16 %v997, %v993
    %v1230 = vpack.c.b16 %v998, %v994
    %v1231 = vpack.c.b16 %v999, %v995
    %v1232 = vpack.c.b16 %v1000, %v996
    %v1233 = vpack.c.b16 %v1005, %v1001
    %v1234 = vpack.c.b16 %v1006, %v1002
    %v1235 = vpack.c.b16 %v1007, %v1003
    %v1236 = vpack.c.b16 %v1008, %v1004
    %v1237 = vpack.c.b16 %v1013, %v1009
    %v1238 = vpack.c.b16 %v1014, %v1010
    %v1239 = vpack.c.b16 %v1015, %v1011
    %v1240 = vpack.c.b16 %v1016, %v1012
    %1465 = vmatprep.subr.bf16.mxu0 %v1046
    %1466 = vmatpush1.bf16.msra.mxu0 %v1045
    %1467 = vmatprep.subr.bf16.mxu0 %v1042
    %1468 = vmatpush1.bf16.msra.mxu0 %v1041
    %1469 = vmatprep.subr.bf16.mxu0 %v1038
    %1470 = vmatpush1.bf16.msra.mxu0 %v1037
    %1471 = vmatprep.subr.bf16.mxu0 %v1034
    %1472 = vmatpush1.bf16.msra.mxu0 %v1033
    %1473 = vmatprep.subr.bf16.mxu0 %v1030
    %1474 = vmatpush1.bf16.msra.mxu0 %v1029
    %1475 = vmatprep.subr.bf16.mxu0 %v1026
    %1476 = vmatpush1.bf16.msra.mxu0 %v1025
    %1477 = vmatprep.subr.bf16.mxu0 %v1022
    %1478 = vmatpush1.bf16.msra.mxu0 %v1021
    %1479 = vmatprep.subr.bf16.mxu0 %v1018
    %1480 = vmatpush1.bf16.msra.mxu0 %v1017
    %1481 = vmatprep.subr.bf16.mxu0 %v1078
    %1482 = vmatpush2.bf16.msra.mxu0 %v1077
    %1483 = vmatprep.subr.bf16.mxu0 %v1074
    %1484 = vmatpush2.bf16.msra.mxu0 %v1073
    %1485 = vmatprep.subr.bf16.mxu0 %v1070
    %1486 = vmatpush2.bf16.msra.mxu0 %v1069
    %1487 = vmatprep.subr.bf16.mxu0 %v1066
    %1488 = vmatpush2.bf16.msra.mxu0 %v1065
    %1489 = vmatprep.subr.bf16.mxu0 %v1062
    %1490 = vmatpush2.bf16.msra.mxu0 %v1061
    %1491 = vmatprep.subr.bf16.mxu0 %v1058
    %1492 = vmatpush2.bf16.msra.mxu0 %v1057
    %1493 = vmatprep.subr.bf16.mxu0 %v1054
    %1494 = vmatpush2.bf16.msra.mxu0 %v1053
    %1495 = vmatprep.subr.bf16.mxu0 %v1050
    %1496 = vmatpush2.bf16.msra.mxu0 %v1049
    %1497 = vmatprep.mubr.bf16.mxu0 %v332
    %1498 = vmatmul.mubr.bf16.gmra.mxu0 %v331
    %v1499 = vpop.f32.mrf.mxu0
    %v1500 = vadd.f32 %v292, %v1499
    %v1501 = vpop.f32.mrf.mxu0
    %v1502 = vadd.f32 %v296, %v1501
    %v1503 = vpop.f32.mrf.mxu0
    %v1504 = vadd.f32 %v292, %v1503
    %v1505 = vpop.f32.mrf.mxu0
    %v1506 = vadd.f32 %v296, %v1505
    %1507 = vdwg.mxu0
    %1508 = vmatprep.subr.bf16.mxu0 %v1110
    %1509 = vmatpush1.bf16.msra.mxu0 %v1109
    %1510 = vmatprep.subr.bf16.mxu0 %v1106
    %1511 = vmatpush1.bf16.msra.mxu0 %v1105
    %1512 = vmatprep.subr.bf16.mxu0 %v1102
    %1513 = vmatpush1.bf16.msra.mxu0 %v1101
    %1514 = vmatprep.subr.bf16.mxu0 %v1098
    %1515 = vmatpush1.bf16.msra.mxu0 %v1097
    %1516 = vmatprep.subr.bf16.mxu0 %v1094
    %1517 = vmatpush1.bf16.msra.mxu0 %v1093
    %1518 = vmatprep.subr.bf16.mxu0 %v1090
    %1519 = vmatpush1.bf16.msra.mxu0 %v1089
    %1520 = vmatprep.subr.bf16.mxu0 %v1086
    %1521 = vmatpush1.bf16.msra.mxu0 %v1085
    %1522 = vmatprep.subr.bf16.mxu0 %v1082
    %1523 = vmatpush1.bf16.msra.mxu0 %v1081
    %1524 = vmatprep.subr.bf16.mxu0 %v1142
    %1525 = vmatpush2.bf16.msra.mxu0 %v1141
    %1526 = vmatprep.subr.bf16.mxu0 %v1138
    %1527 = vmatpush2.bf16.msra.mxu0 %v1137
    %1528 = vmatprep.subr.bf16.mxu0 %v1134
    %1529 = vmatpush2.bf16.msra.mxu0 %v1133
    %1530 = vmatprep.subr.bf16.mxu0 %v1130
    %1531 = vmatpush2.bf16.msra.mxu0 %v1129
    %1532 = vmatprep.subr.bf16.mxu0 %v1126
    %1533 = vmatpush2.bf16.msra.mxu0 %v1125
    %1534 = vmatprep.subr.bf16.mxu0 %v1122
    %1535 = vmatpush2.bf16.msra.mxu0 %v1121
    %1536 = vmatprep.subr.bf16.mxu0 %v1118
    %1537 = vmatpush2.bf16.msra.mxu0 %v1117
    %1538 = vmatprep.subr.bf16.mxu0 %v1114
    %1539 = vmatpush2.bf16.msra.mxu0 %v1113
    %1540 = vmatprep.mubr.bf16.mxu0 %v334
    %1541 = vmatmul.mubr.bf16.gmra.mxu0 %v333
    %v1542 = vpop.f32.mrf.mxu0
    %v1543 = vadd.f32 %v1500, %v1542
    %v1544 = vpop.f32.mrf.mxu0
    %v1545 = vadd.f32 %v1502, %v1544
    %v1546 = vpop.f32.mrf.mxu0
    %v1547 = vadd.f32 %v1504, %v1546
    %v1548 = vpop.f32.mrf.mxu0
    %v1549 = vadd.f32 %v1506, %v1548
    %1550 = vdwg.mxu0
    %1551 = vmatprep.subr.bf16.mxu0 %v1174
    %1552 = vmatpush1.bf16.msra.mxu0 %v1173
    %1553 = vmatprep.subr.bf16.mxu0 %v1170
    %1554 = vmatpush1.bf16.msra.mxu0 %v1169
    %1555 = vmatprep.subr.bf16.mxu0 %v1166
    %1556 = vmatpush1.bf16.msra.mxu0 %v1165
    %1557 = vmatprep.subr.bf16.mxu0 %v1162
    %1558 = vmatpush1.bf16.msra.mxu0 %v1161
    %1559 = vmatprep.subr.bf16.mxu0 %v1158
    %1560 = vmatpush1.bf16.msra.mxu0 %v1157
    %1561 = vmatprep.subr.bf16.mxu0 %v1154
    %1562 = vmatpush1.bf16.msra.mxu0 %v1153
    %1563 = vmatprep.subr.bf16.mxu0 %v1150
    %1564 = vmatpush1.bf16.msra.mxu0 %v1149
    %1565 = vmatprep.subr.bf16.mxu0 %v1146
    %1566 = vmatpush1.bf16.msra.mxu0 %v1145
    %1567 = vmatprep.subr.bf16.mxu0 %v1206
    %1568 = vmatpush2.bf16.msra.mxu0 %v1205
    %1569 = vmatprep.subr.bf16.mxu0 %v1202
    %1570 = vmatpush2.bf16.msra.mxu0 %v1201
    %1571 = vmatprep.subr.bf16.mxu0 %v1198
    %1572 = vmatpush2.bf16.msra.mxu0 %v1197
    %1573 = vmatprep.subr.bf16.mxu0 %v1194
    %1574 = vmatpush2.bf16.msra.mxu0 %v1193
    %1575 = vmatprep.subr.bf16.mxu0 %v1190
    %1576 = vmatpush2.bf16.msra.mxu0 %v1189
    %1577 = vmatprep.subr.bf16.mxu0 %v1186
    %1578 = vmatpush2.bf16.msra.mxu0 %v1185
    %1579 = vmatprep.subr.bf16.mxu0 %v1182
    %1580 = vmatpush2.bf16.msra.mxu0 %v1181
    %1581 = vmatprep.subr.bf16.mxu0 %v1178
    %1582 = vmatpush2.bf16.msra.mxu0 %v1177
    %1583 = vmatprep.mubr.bf16.mxu0 %v336
    %1584 = vmatmul.mubr.bf16.gmra.mxu0 %v335
    %v1585 = vpop.f32.mrf.mxu0
    %v1586 = vadd.f32 %v1543, %v1585
    %v1587 = vpop.f32.mrf.mxu0
    %v1588 = vadd.f32 %v1545, %v1587
    %v1589 = vpop.f32.mrf.mxu0
    %v1590 = vadd.f32 %v1547, %v1589
    %v1591 = vpop.f32.mrf.mxu0
    %v1592 = vadd.f32 %v1549, %v1591
    %1593 = vdwg.mxu0
    %1594 = vmatprep.subr.bf16.mxu0 %v1238
    %1595 = vmatpush1.bf16.msra.mxu0 %v1237
    %1596 = vmatprep.subr.bf16.mxu0 %v1234
    %1597 = vmatpush1.bf16.msra.mxu0 %v1233
    %1598 = vmatprep.subr.bf16.mxu0 %v1230
    %1599 = vmatpush1.bf16.msra.mxu0 %v1229
    %1600 = vmatprep.subr.bf16.mxu0 %v1226
    %1601 = vmatpush1.bf16.msra.mxu0 %v1225
    %1602 = vmatprep.subr.bf16.mxu0 %v1222
    %1603 = vmatpush1.bf16.msra.mxu0 %v1221
    %1604 = vmatprep.subr.bf16.mxu0 %v1218
    %1605 = vmatpush1.bf16.msra.mxu0 %v1217
    %1606 = vmatprep.subr.bf16.mxu0 %v1214
    %1607 = vmatpush1.bf16.msra.mxu0 %v1213
    %1608 = vmatprep.subr.bf16.mxu0 %v1210
    %1609 = vmatpush1.bf16.msra.mxu0 %v1209
    %1610 = vmatprep.subr.bf16.mxu0 0
    %1611 = vmatpush2.bf16.msra.mxu0 0
    %1612 = vmatprep.subr.bf16.mxu0 0
    %1613 = vmatpush2.bf16.msra.mxu0 0
    %1614 = vmatprep.subr.bf16.mxu0 0
    %1615 = vmatpush2.bf16.msra.mxu0 0
    %1616 = vmatprep.subr.bf16.mxu0 0
    %1617 = vmatpush2.bf16.msra.mxu0 0
    %1618 = vmatprep.subr.bf16.mxu0 0
    %1619 = vmatpush2.bf16.msra.mxu0 0
    %1620 = vmatprep.subr.bf16.mxu0 0
    %1621 = vmatpush2.bf16.msra.mxu0 0
    %1622 = vmatprep.subr.bf16.mxu0 0
    %1623 = vmatpush2.bf16.msra.mxu0 0
    %1624 = vmatprep.subr.bf16.mxu0 0
    %1625 = vmatpush2.bf16.msra.mxu0 0
    %1626 = vmatprep.mubr.bf16.mxu0 0
    %1627 = vmatmul.mubr.bf16.gmra.mxu0 %v337
    %v1628 = vpop.f32.mrf.mxu0
    %v1629 = vadd.f32 %v1586, %v1628
    %v1630 = vpop.f32.mrf.mxu0
    %v1631 = vadd.f32 %v1588, %v1630
    %v1632 = vpop.f32.mrf.mxu0
    %v1633 = vadd.f32 %v1590, %v1632
    %v1634 = vpop.f32.mrf.mxu0
    %v1635 = vadd.f32 %v1592, %v1634
    %1636 = vdwg.mxu0
    %1637 = vmatprep.subr.bf16.mxu0 %v1048
    %1638 = vmatpush1.bf16.msra.mxu0 %v1047
    %1639 = vmatprep.subr.bf16.mxu0 %v1044
    %1640 = vmatpush1.bf16.msra.mxu0 %v1043
    %1641 = vmatprep.subr.bf16.mxu0 %v1040
    %1642 = vmatpush1.bf16.msra.mxu0 %v1039
    %1643 = vmatprep.subr.bf16.mxu0 %v1036
    %1644 = vmatpush1.bf16.msra.mxu0 %v1035
    %1645 = vmatprep.subr.bf16.mxu0 %v1032
    %1646 = vmatpush1.bf16.msra.mxu0 %v1031
    %1647 = vmatprep.subr.bf16.mxu0 %v1028
    %1648 = vmatpush1.bf16.msra.mxu0 %v1027
    %1649 = vmatprep.subr.bf16.mxu0 %v1024
    %1650 = vmatpush1.bf16.msra.mxu0 %v1023
    %1651 = vmatprep.subr.bf16.mxu0 %v1020
    %1652 = vmatpush1.bf16.msra.mxu0 %v1019
    %1653 = vmatprep.subr.bf16.mxu0 %v1080
    %1654 = vmatpush2.bf16.msra.mxu0 %v1079
    %1655 = vmatprep.subr.bf16.mxu0 %v1076
    %1656 = vmatpush2.bf16.msra.mxu0 %v1075
    %1657 = vmatprep.subr.bf16.mxu0 %v1072
    %1658 = vmatpush2.bf16.msra.mxu0 %v1071
    %1659 = vmatprep.subr.bf16.mxu0 %v1068
    %1660 = vmatpush2.bf16.msra.mxu0 %v1067
    %1661 = vmatprep.subr.bf16.mxu0 %v1064
    %1662 = vmatpush2.bf16.msra.mxu0 %v1063
    %1663 = vmatprep.subr.bf16.mxu0 %v1060
    %1664 = vmatpush2.bf16.msra.mxu0 %v1059
    %1665 = vmatprep.subr.bf16.mxu0 %v1056
    %1666 = vmatpush2.bf16.msra.mxu0 %v1055
    %1667 = vmatprep.subr.bf16.mxu0 %v1052
    %1668 = vmatpush2.bf16.msra.mxu0 %v1051
    %1669 = vmatprep.mubr.bf16.mxu0 %v332
    %1670 = vmatmul.mubr.bf16.gmra.mxu0 %v331
    %v1671 = vpop.f32.mrf.mxu0
    %v1672 = vadd.f32 %v300, %v1671
    %v1673 = vpop.f32.mrf.mxu0
    %v1674 = vadd.f32 %v304, %v1673
    %v1675 = vpop.f32.mrf.mxu0
    %v1676 = vadd.f32 %v300, %v1675
    %v1677 = vpop.f32.mrf.mxu0
    %v1678 = vadd.f32 %v304, %v1677
    %1679 = vdwg.mxu0
    %1680 = vmatprep.subr.bf16.mxu0 %v1112
    %1681 = vmatpush1.bf16.msra.mxu0 %v1111
    %1682 = vmatprep.subr.bf16.mxu0 %v1108
    %1683 = vmatpush1.bf16.msra.mxu0 %v1107
    %1684 = vmatprep.subr.bf16.mxu0 %v1104
    %1685 = vmatpush1.bf16.msra.mxu0 %v1103
    %1686 = vmatprep.subr.bf16.mxu0 %v1100
    %1687 = vmatpush1.bf16.msra.mxu0 %v1099
    %1688 = vmatprep.subr.bf16.mxu0 %v1096
    %1689 = vmatpush1.bf16.msra.mxu0 %v1095
    %1690 = vmatprep.subr.bf16.mxu0 %v1092
    %1691 = vmatpush1.bf16.msra.mxu0 %v1091
    %1692 = vmatprep.subr.bf16.mxu0 %v1088
    %1693 = vmatpush1.bf16.msra.mxu0 %v1087
    %1694 = vmatprep.subr.bf16.mxu0 %v1084
    %1695 = vmatpush1.bf16.msra.mxu0 %v1083
    %1696 = vmatprep.subr.bf16.mxu0 %v1144
    %1697 = vmatpush2.bf16.msra.mxu0 %v1143
    %1698 = vmatprep.subr.bf16.mxu0 %v1140
    %1699 = vmatpush2.bf16.msra.mxu0 %v1139
    %1700 = vmatprep.subr.bf16.mxu0 %v1136
    %1701 = vmatpush2.bf16.msra.mxu0 %v1135
    %1702 = vmatprep.subr.bf16.mxu0 %v1132
    %1703 = vmatpush2.bf16.msra.mxu0 %v1131
    %1704 = vmatprep.subr.bf16.mxu0 %v1128
    %1705 = vmatpush2.bf16.msra.mxu0 %v1127
    %1706 = vmatprep.subr.bf16.mxu0 %v1124
    %1707 = vmatpush2.bf16.msra.mxu0 %v1123
    %1708 = vmatprep.subr.bf16.mxu0 %v1120
    %1709 = vmatpush2.bf16.msra.mxu0 %v1119
    %1710 = vmatprep.subr.bf16.mxu0 %v1116
    %1711 = vmatpush2.bf16.msra.mxu0 %v1115
    %1712 = vmatprep.mubr.bf16.mxu0 %v334
    %1713 = vmatmul.mubr.bf16.gmra.mxu0 %v333
    %v1714 = vpop.f32.mrf.mxu0
    %v1715 = vadd.f32 %v1672, %v1714
    %v1716 = vpop.f32.mrf.mxu0
    %v1717 = vadd.f32 %v1674, %v1716
    %v1718 = vpop.f32.mrf.mxu0
    %v1719 = vadd.f32 %v1676, %v1718
    %v1720 = vpop.f32.mrf.mxu0
    %v1721 = vadd.f32 %v1678, %v1720
    %1722 = vdwg.mxu0
    %1723 = vmatprep.subr.bf16.mxu0 %v1176
    %1724 = vmatpush1.bf16.msra.mxu0 %v1175
    %1725 = vmatprep.subr.bf16.mxu0 %v1172
    %1726 = vmatpush1.bf16.msra.mxu0 %v1171
    %1727 = vmatprep.subr.bf16.mxu0 %v1168
    %1728 = vmatpush1.bf16.msra.mxu0 %v1167
    %1729 = vmatprep.subr.bf16.mxu0 %v1164
    %1730 = vmatpush1.bf16.msra.mxu0 %v1163
    %1731 = vmatprep.subr.bf16.mxu0 %v1160
    %1732 = vmatpush1.bf16.msra.mxu0 %v1159
    %1733 = vmatprep.subr.bf16.mxu0 %v1156
    %1734 = vmatpush1.bf16.msra.mxu0 %v1155
    %1735 = vmatprep.subr.bf16.mxu0 %v1152
    %1736 = vmatpush1.bf16.msra.mxu0 %v1151
    %1737 = vmatprep.subr.bf16.mxu0 %v1148
    %1738 = vmatpush1.bf16.msra.mxu0 %v1147
    %1739 = vmatprep.subr.bf16.mxu0 %v1208
    %1740 = vmatpush2.bf16.msra.mxu0 %v1207
    %1741 = vmatprep.subr.bf16.mxu0 %v1204
    %1742 = vmatpush2.bf16.msra.mxu0 %v1203
    %1743 = vmatprep.subr.bf16.mxu0 %v1200
    %1744 = vmatpush2.bf16.msra.mxu0 %v1199
    %1745 = vmatprep.subr.bf16.mxu0 %v1196
    %1746 = vmatpush2.bf16.msra.mxu0 %v1195
    %1747 = vmatprep.subr.bf16.mxu0 %v1192
    %1748 = vmatpush2.bf16.msra.mxu0 %v1191
    %1749 = vmatprep.subr.bf16.mxu0 %v1188
    %1750 = vmatpush2.bf16.msra.mxu0 %v1187
    %1751 = vmatprep.subr.bf16.mxu0 %v1184
    %1752 = vmatpush2.bf16.msra.mxu0 %v1183
    %1753 = vmatprep.subr.bf16.mxu0 %v1180
    %1754 = vmatpush2.bf16.msra.mxu0 %v1179
    %1755 = vmatprep.mubr.bf16.mxu0 %v336
    %1756 = vmatmul.mubr.bf16.gmra.mxu0 %v335
    %v1757 = vpop.f32.mrf.mxu0
    %v1758 = vadd.f32 %v1715, %v1757
    %v1759 = vpop.f32.mrf.mxu0
    %v1760 = vadd.f32 %v1717, %v1759
    %v1761 = vpop.f32.mrf.mxu0
    %v1762 = vadd.f32 %v1719, %v1761
    %v1763 = vpop.f32.mrf.mxu0
    %v1764 = vadd.f32 %v1721, %v1763
    %1765 = vdwg.mxu0
    %1766 = vmatprep.subr.bf16.mxu0 %v1240
    %1767 = vmatpush1.bf16.msra.mxu0 %v1239
    %1768 = vmatprep.subr.bf16.mxu0 %v1236
    %1769 = vmatpush1.bf16.msra.mxu0 %v1235
    %1770 = vmatprep.subr.bf16.mxu0 %v1232
    %1771 = vmatpush1.bf16.msra.mxu0 %v1231
    %1772 = vmatprep.subr.bf16.mxu0 %v1228
    %1773 = vmatpush1.bf16.msra.mxu0 %v1227
    %1774 = vmatprep.subr.bf16.mxu0 %v1224
    %1775 = vmatpush1.bf16.msra.mxu0 %v1223
    %1776 = vmatprep.subr.bf16.mxu0 %v1220
    %1777 = vmatpush1.bf16.msra.mxu0 %v1219
    %1778 = vmatprep.subr.bf16.mxu0 %v1216
    %1779 = vmatpush1.bf16.msra.mxu0 %v1215
    %1780 = vmatprep.subr.bf16.mxu0 %v1212
    %1781 = vmatpush1.bf16.msra.mxu0 %v1211
    %1782 = vmatprep.subr.bf16.mxu0 0
    %1783 = vmatpush2.bf16.msra.mxu0 0
    %1784 = vmatprep.subr.bf16.mxu0 0
    %1785 = vmatpush2.bf16.msra.mxu0 0
    %1786 = vmatprep.subr.bf16.mxu0 0
    %1787 = vmatpush2.bf16.msra.mxu0 0
    %1788 = vmatprep.subr.bf16.mxu0 0
    %1789 = vmatpush2.bf16.msra.mxu0 0
    %1790 = vmatprep.subr.bf16.mxu0 0
    %1791 = vmatpush2.bf16.msra.mxu0 0
    %1792 = vmatprep.subr.bf16.mxu0 0
    %1793 = vmatpush2.bf16.msra.mxu0 0
    %1794 = vmatprep.subr.bf16.mxu0 0
    %1795 = vmatpush2.bf16.msra.mxu0 0
    %1796 = vmatprep.subr.bf16.mxu0 0
    %1797 = vmatpush2.bf16.msra.mxu0 0
    %1798 = vmatprep.mubr.bf16.mxu0 0
    %1799 = vmatmul.mubr.bf16.gmra.mxu0 %v337
    %v1800 = vpop.f32.mrf.mxu0
    %v1801 = vadd.f32 %v1758, %v1800
    %v1802 = vpop.f32.mrf.mxu0
    %v1803 = vadd.f32 %v1760, %v1802
    %v1804 = vpop.f32.mrf.mxu0
    %v1805 = vadd.f32 %v1762, %v1804
    %v1806 = vpop.f32.mrf.mxu0
    %v1807 = vadd.f32 %v1764, %v1806
    %1808 = vdwg.mxu0
    %v1809 = vmax.f32 %v1629, 0.0
    %v1810 = vmax.f32 %v1631, 0.0
    %v1811 = vmax.f32 %v1801, 0.0
    %v1812 = vmax.f32 %v1803, 0.0
    %v1813 = vmax.f32 %v1633, 0.0
    %v1814 = vmax.f32 %v1635, 0.0
    %v1815 = vmax.f32 %v1805, 0.0
    %v1816 = vmax.f32 %v1807, 0.0
    %v1817 = vpack.c.bf16 %v1813, %v1809
    %v1818 = vpack.c.bf16 %v1814, %v1810
    %v1819 = vpack.c.bf16 %v1815, %v1811
    %v1820 = vpack.c.bf16 %v1816, %v1812
    %v1821 = vld [vmem:[#allocation4] sm:$0xff]
    %v1822 = vld [vmem:[#allocation4 + $0x8] sm:$0xff]
    %v1823 = vld [vmem:[#allocation4 + $0x10] sm:$0xff]
    %v1824 = vld [vmem:[#allocation4 + $0x18] sm:$0xff]
    %v1825 = vld [vmem:[#allocation4 + $0x20] sm:$0xff]
    %v1826 = vld [vmem:[#allocation4 + $0x28] sm:$0xff]
    %v1827 = vld [vmem:[#allocation4 + $0x30] sm:$0xff]
    %v1828 = vld [vmem:[#allocation4 + $0x38] sm:$0xff]
    %v1829 = vld [vmem:[#allocation4 + $0x40] sm:$0xff]
    %v1830 = vld [vmem:[#allocation4 + $0x48] sm:$0xff]
    %v1831 = vld [vmem:[#allocation4 + $0x50] sm:$0xff]
    %v1832 = vld [vmem:[#allocation4 + $0x58] sm:$0xff]
    %v1833 = vld [vmem:[#allocation4 + $0x60] sm:$0xff]
    %v1834 = vld [vmem:[#allocation4 + $0x68] sm:$0xff]
    %v1835 = vld [vmem:[#allocation4 + $0x70] sm:$0xff]
    %v1836 = vld [vmem:[#allocation4 + $0x78] sm:$0xff]
    %v1837 = vld [vmem:[#allocation4 + $0x80] sm:$0xff]
    %v1838 = vld [vmem:[#allocation4 + $0x88] sm:$0xff]
    %v1839 = vld [vmem:[#allocation4 + $0x90] sm:$0xff]
    %v1840 = vld [vmem:[#allocation4 + $0x98] sm:$0xff]
    %v1841 = vld [vmem:[#allocation4 + $0xa0] sm:$0xff]
    %v1842 = vld [vmem:[#allocation4 + $0xa8] sm:$0xff]
    %v1843 = vld [vmem:[#allocation4 + $0xb0] sm:$0xff]
    %v1844 = vld [vmem:[#allocation4 + $0xb8] sm:$0xff]
    %v1845 = vld [vmem:[#allocation4 + $0xc0] sm:$0xff]
    %v1846 = vld [vmem:[#allocation4 + $0xc8] sm:$0xff]
    %v1847 = vld [vmem:[#allocation4 + $0xd0] sm:$0xff]
    %v1848 = vld [vmem:[#allocation4 + $0xd8] sm:$0xff]
    %v1849 = vld [vmem:[#allocation4 + $0xe0] sm:$0xff]
    %v1850 = vld [vmem:[#allocation4 + $0xe8] sm:$0xff]
    %v1851 = vld [vmem:[#allocation4 + $0xf0] sm:$0xff]
    %v1852 = vld [vmem:[#allocation4 + $0xf8] sm:$0xff]
    %v1853 = vld [vmem:[#allocation4 + $0x100] sm:$0xff]
    %v1854 = vld [vmem:[#allocation4 + $0x108] sm:$0xff]
    %v1855 = vld [vmem:[#allocation4 + $0x110] sm:$0xff]
    %v1856 = vld [vmem:[#allocation4 + $0x118] sm:$0xff]
    %v1857 = vld [vmem:[#allocation4 + $0x120] sm:$0xff]
    %v1858 = vld [vmem:[#allocation4 + $0x128] sm:$0xff]
    %v1859 = vld [vmem:[#allocation4 + $0x130] sm:$0xff]
    %v1860 = vld [vmem:[#allocation4 + $0x138] sm:$0xff]
    %v1861 = vld [vmem:[#allocation4 + $0x140] sm:$0xff]
    %v1862 = vld [vmem:[#allocation4 + $0x148] sm:$0xff]
    %v1863 = vld [vmem:[#allocation4 + $0x150] sm:$0xff]
    %v1864 = vld [vmem:[#allocation4 + $0x158] sm:$0xff]
    %v1865 = vld [vmem:[#allocation4 + $0x160] sm:$0xff]
    %v1866 = vld [vmem:[#allocation4 + $0x168] sm:$0xff]
    %v1867 = vld [vmem:[#allocation4 + $0x170] sm:$0xff]
    %v1868 = vld [vmem:[#allocation4 + $0x178] sm:$0xff]
    %v1869 = vld [vmem:[#allocation4 + $0x180] sm:$0xff]
    %v1870 = vld [vmem:[#allocation4 + $0x188] sm:$0xff]
    %v1871 = vld [vmem:[#allocation4 + $0x190] sm:$0xff]
    %v1872 = vld [vmem:[#allocation4 + $0x198] sm:$0xff]
    %v1873 = vld [vmem:[#allocation4 + $0x1a0] sm:$0xff]
    %v1874 = vld [vmem:[#allocation4 + $0x1a8] sm:$0xff]
    %v1875 = vld [vmem:[#allocation4 + $0x1b0] sm:$0xff]
    %v1876 = vld [vmem:[#allocation4 + $0x1b8] sm:$0xff]
    %v1877 = vld [vmem:[#allocation4 + $0x1c0] sm:$0xff]
    %v1878 = vld [vmem:[#allocation4 + $0x1c8] sm:$0xff]
    %v1879 = vld [vmem:[#allocation4 + $0x1d0] sm:$0xff]
    %v1880 = vld [vmem:[#allocation4 + $0x1d8] sm:$0xff]
    %v1881 = vld [vmem:[#allocation4 + $0x1e0] sm:$0xff]
    %v1882 = vld [vmem:[#allocation4 + $0x1e8] sm:$0xff]
    %v1883 = vld [vmem:[#allocation4 + $0x1f0] sm:$0xff]
    %v1884 = vld [vmem:[#allocation4 + $0x1f8] sm:$0xff]
    %v1885 = vld [vmem:[#allocation4 + $0x200] sm:$0xff]
    %v1886 = vld [vmem:[#allocation4 + $0x208] sm:$0xff]
    %v1887 = vld [vmem:[#allocation4 + $0x210] sm:$0xff]
    %v1888 = vld [vmem:[#allocation4 + $0x218] sm:$0xff]
    %v1889 = vld [vmem:[#allocation4 + $0x220] sm:$0xff]
    %v1890 = vld [vmem:[#allocation4 + $0x228] sm:$0xff]
    %v1891 = vld [vmem:[#allocation4 + $0x230] sm:$0xff]
    %v1892 = vld [vmem:[#allocation4 + $0x238] sm:$0xff]
    %v1893 = vld [vmem:[#allocation4 + $0x240] sm:$0xff]
    %v1894 = vld [vmem:[#allocation4 + $0x248] sm:$0xff]
    %v1895 = vld [vmem:[#allocation4 + $0x250] sm:$0xff]
    %v1896 = vld [vmem:[#allocation4 + $0x258] sm:$0xff]
    %v1897 = vld [vmem:[#allocation4 + $0x260] sm:$0xff]
    %v1898 = vld [vmem:[#allocation4 + $0x268] sm:$0xff]
    %v1899 = vld [vmem:[#allocation4 + $0x270] sm:$0xff]
    %v1900 = vld [vmem:[#allocation4 + $0x278] sm:$0xff]
    %v1901 = vld [vmem:[#allocation4 + $0x280] sm:$0xff]
    %v1902 = vld [vmem:[#allocation4 + $0x288] sm:$0xff]
    %v1903 = vld [vmem:[#allocation4 + $0x290] sm:$0xff]
    %v1904 = vld [vmem:[#allocation4 + $0x298] sm:$0xff]
    %v1905 = vld [vmem:[#allocation4 + $0x2a0] sm:$0xff]
    %v1906 = vld [vmem:[#allocation4 + $0x2a8] sm:$0xff]
    %v1907 = vld [vmem:[#allocation4 + $0x2b0] sm:$0xff]
    %v1908 = vld [vmem:[#allocation4 + $0x2b8] sm:$0xff]
    %v1909 = vld [vmem:[#allocation4 + $0x2c0] sm:$0xff]
    %v1910 = vld [vmem:[#allocation4 + $0x2c8] sm:$0xff]
    %v1911 = vld [vmem:[#allocation4 + $0x2d0] sm:$0xff]
    %v1912 = vld [vmem:[#allocation4 + $0x2d8] sm:$0xff]
    %v1913 = vld [vmem:[#allocation4 + $0x2e0] sm:$0xff]
    %v1914 = vld [vmem:[#allocation4 + $0x2e8] sm:$0xff]
    %v1915 = vld [vmem:[#allocation4 + $0x2f0] sm:$0xff]
    %v1916 = vld [vmem:[#allocation4 + $0x2f8] sm:$0xff]
    %v1917 = vld [vmem:[#allocation4 + $0x300] sm:$0xff]
    %v1918 = vld [vmem:[#allocation4 + $0x308] sm:$0xff]
    %v1919 = vld [vmem:[#allocation4 + $0x310] sm:$0xff]
    %v1920 = vld [vmem:[#allocation4 + $0x318] sm:$0xff]
    %v1921 = vld [vmem:[#allocation4 + $0x320] sm:$0xff]
    %v1922 = vld [vmem:[#allocation4 + $0x328] sm:$0xff]
    %v1923 = vld [vmem:[#allocation4 + $0x330] sm:$0xff]
    %v1924 = vld [vmem:[#allocation4 + $0x338] sm:$0xff]
    %v1925 = vld [vmem:[#allocation4 + $0x340] sm:$0xff]
    %v1926 = vld [vmem:[#allocation4 + $0x348] sm:$0xff]
    %v1927 = vld [vmem:[#allocation4 + $0x350] sm:$0xff]
    %v1928 = vld [vmem:[#allocation4 + $0x358] sm:$0xff]
    %v1929 = vld [vmem:[#allocation4 + $0x360] sm:$0xff]
    %v1930 = vld [vmem:[#allocation4 + $0x368] sm:$0xff]
    %v1931 = vld [vmem:[#allocation4 + $0x370] sm:$0xff]
    %v1932 = vld [vmem:[#allocation4 + $0x378] sm:$0xff]
    %v1933 = vld [vmem:[#allocation4 + $0x380] sm:$0xff]
    %v1934 = vld [vmem:[#allocation4 + $0x388] sm:$0xff]
    %v1935 = vld [vmem:[#allocation4 + $0x390] sm:$0xff]
    %v1936 = vld [vmem:[#allocation4 + $0x398] sm:$0xff]
    %v1937 = vld [vmem:[#allocation4 + $0x3a0] sm:$0xff]
    %v1938 = vld [vmem:[#allocation4 + $0x3a8] sm:$0xff]
    %v1939 = vld [vmem:[#allocation4 + $0x3b0] sm:$0xff]
    %v1940 = vld [vmem:[#allocation4 + $0x3b8] sm:$0xff]
    %v1941 = vld [vmem:[#allocation4 + $0x3c0] sm:$0xff]
    %v1942 = vld [vmem:[#allocation4 + $0x3c8] sm:$0xff]
    %v1943 = vld [vmem:[#allocation4 + $0x3d0] sm:$0xff]
    %v1944 = vld [vmem:[#allocation4 + $0x3d8] sm:$0xff]
    %v1945 = vld [vmem:[#allocation4 + $0x3e0] sm:$0xff]
    %v1946 = vld [vmem:[#allocation4 + $0x3e8] sm:$0xff]
    %v1947 = vld [vmem:[#allocation4 + $0x3f0] sm:$0xff]
    %v1948 = vld [vmem:[#allocation4 + $0x3f8] sm:$0xff]
    %v1949 = vld [vmem:[%s4] sm:$0xf]
    %v1951 = vlaneseq
    %v1952 = vshrl.u32 %v1951, 7
    %v1953 = vsub.s32 0, %v1952
    %v1954 = vrot.slane %v1949, %v1953
    %v1955 = vlaneseq
    %v1956 = vshrl.u32 %v1955, 7
    %v1957 = vsub.s32 1, %v1956
    %v1958 = vrot.slane %v1949, %v1957
    %v1959 = vlaneseq
    %v1960 = vshrl.u32 %v1959, 7
    %v1961 = vsub.s32 2, %v1960
    %v1962 = vrot.slane %v1949, %v1961
    %v1963 = vlaneseq
    %v1964 = vshrl.u32 %v1963, 7
    %v1965 = vsub.s32 3, %v1964
    %v1966 = vrot.slane %v1949, %v1965
    %v2099 = vunpack.c.l.b16 %v1821
    %v2100 = vunpack.c.h.b16 %v1821
    %v2101 = vunpack.c.l.b16 %v1822
    %v2102 = vunpack.c.h.b16 %v1822
    %v2103 = vunpack.c.l.b16 %v1823
    %v2104 = vunpack.c.h.b16 %v1823
    %v2105 = vunpack.c.l.b16 %v1824
    %v2106 = vunpack.c.h.b16 %v1824
    %v2107 = vunpack.c.l.b16 %v1825
    %v2108 = vunpack.c.h.b16 %v1825
    %v2109 = vunpack.c.l.b16 %v1826
    %v2110 = vunpack.c.h.b16 %v1826
    %v2111 = vunpack.c.l.b16 %v1827
    %v2112 = vunpack.c.h.b16 %v1827
    %v2113 = vunpack.c.l.b16 %v1828
    %v2114 = vunpack.c.h.b16 %v1828
    %v2115 = vunpack.c.l.b16 %v1829
    %v2116 = vunpack.c.h.b16 %v1829
    %v2117 = vunpack.c.l.b16 %v1830
    %v2118 = vunpack.c.h.b16 %v1830
    %v2119 = vunpack.c.l.b16 %v1831
    %v2120 = vunpack.c.h.b16 %v1831
    %v2121 = vunpack.c.l.b16 %v1832
    %v2122 = vunpack.c.h.b16 %v1832
    %v2123 = vunpack.c.l.b16 %v1833
    %v2124 = vunpack.c.h.b16 %v1833
    %v2125 = vunpack.c.l.b16 %v1834
    %v2126 = vunpack.c.h.b16 %v1834
    %v2127 = vunpack.c.l.b16 %v1835
    %v2128 = vunpack.c.h.b16 %v1835
    %v2129 = vunpack.c.l.b16 %v1836
    %v2130 = vunpack.c.h.b16 %v1836
    %v2131 = vunpack.c.l.b16 %v1837
    %v2132 = vunpack.c.h.b16 %v1837
    %v2133 = vunpack.c.l.b16 %v1838
    %v2134 = vunpack.c.h.b16 %v1838
    %v2135 = vunpack.c.l.b16 %v1839
    %v2136 = vunpack.c.h.b16 %v1839
    %v2137 = vunpack.c.l.b16 %v1840
    %v2138 = vunpack.c.h.b16 %v1840
    %v2139 = vunpack.c.l.b16 %v1841
    %v2140 = vunpack.c.h.b16 %v1841
    %v2141 = vunpack.c.l.b16 %v1842
    %v2142 = vunpack.c.h.b16 %v1842
    %v2143 = vunpack.c.l.b16 %v1843
    %v2144 = vunpack.c.h.b16 %v1843
    %v2145 = vunpack.c.l.b16 %v1844
    %v2146 = vunpack.c.h.b16 %v1844
    %v2147 = vunpack.c.l.b16 %v1845
    %v2148 = vunpack.c.h.b16 %v1845
    %v2149 = vunpack.c.l.b16 %v1846
    %v2150 = vunpack.c.h.b16 %v1846
    %v2151 = vunpack.c.l.b16 %v1847
    %v2152 = vunpack.c.h.b16 %v1847
    %v2153 = vunpack.c.l.b16 %v1848
    %v2154 = vunpack.c.h.b16 %v1848
    %v2155 = vunpack.c.l.b16 %v1849
    %v2156 = vunpack.c.h.b16 %v1849
    %v2157 = vunpack.c.l.b16 %v1850
    %v2158 = vunpack.c.h.b16 %v1850
    %v2159 = vunpack.c.l.b16 %v1851
    %v2160 = vunpack.c.h.b16 %v1851
    %v2161 = vunpack.c.l.b16 %v1852
    %v2162 = vunpack.c.h.b16 %v1852
    %v2163 = vunpack.c.l.b16 %v1853
    %v2164 = vunpack.c.h.b16 %v1853
    %v2165 = vunpack.c.l.b16 %v1854
    %v2166 = vunpack.c.h.b16 %v1854
    %v2167 = vunpack.c.l.b16 %v1855
    %v2168 = vunpack.c.h.b16 %v1855
    %v2169 = vunpack.c.l.b16 %v1856
    %v2170 = vunpack.c.h.b16 %v1856
    %v2171 = vunpack.c.l.b16 %v1857
    %v2172 = vunpack.c.h.b16 %v1857
    %v2173 = vunpack.c.l.b16 %v1858
    %v2174 = vunpack.c.h.b16 %v1858
    %v2175 = vunpack.c.l.b16 %v1859
    %v2176 = vunpack.c.h.b16 %v1859
    %v2177 = vunpack.c.l.b16 %v1860
    %v2178 = vunpack.c.h.b16 %v1860
    %v2179 = vunpack.c.l.b16 %v1861
    %v2180 = vunpack.c.h.b16 %v1861
    %v2181 = vunpack.c.l.b16 %v1862
    %v2182 = vunpack.c.h.b16 %v1862
    %v2183 = vunpack.c.l.b16 %v1863
    %v2184 = vunpack.c.h.b16 %v1863
    %v2185 = vunpack.c.l.b16 %v1864
    %v2186 = vunpack.c.h.b16 %v1864
    %v2187 = vunpack.c.l.b16 %v1865
    %v2188 = vunpack.c.h.b16 %v1865
    %v2189 = vunpack.c.l.b16 %v1866
    %v2190 = vunpack.c.h.b16 %v1866
    %v2191 = vunpack.c.l.b16 %v1867
    %v2192 = vunpack.c.h.b16 %v1867
    %v2193 = vunpack.c.l.b16 %v1868
    %v2194 = vunpack.c.h.b16 %v1868
    %v2195 = vunpack.c.l.b16 %v1869
    %v2196 = vunpack.c.h.b16 %v1869
    %v2197 = vunpack.c.l.b16 %v1870
    %v2198 = vunpack.c.h.b16 %v1870
    %v2199 = vunpack.c.l.b16 %v1871
    %v2200 = vunpack.c.h.b16 %v1871
    %v2201 = vunpack.c.l.b16 %v1872
    %v2202 = vunpack.c.h.b16 %v1872
    %v2203 = vunpack.c.l.b16 %v1873
    %v2204 = vunpack.c.h.b16 %v1873
    %v2205 = vunpack.c.l.b16 %v1874
    %v2206 = vunpack.c.h.b16 %v1874
    %v2207 = vunpack.c.l.b16 %v1875
    %v2208 = vunpack.c.h.b16 %v1875
    %v2209 = vunpack.c.l.b16 %v1876
    %v2210 = vunpack.c.h.b16 %v1876
    %v2211 = vunpack.c.l.b16 %v1877
    %v2212 = vunpack.c.h.b16 %v1877
    %v2213 = vunpack.c.l.b16 %v1878
    %v2214 = vunpack.c.h.b16 %v1878
    %v2215 = vunpack.c.l.b16 %v1879
    %v2216 = vunpack.c.h.b16 %v1879
    %v2217 = vunpack.c.l.b16 %v1880
    %v2218 = vunpack.c.h.b16 %v1880
    %v2219 = vunpack.c.l.b16 %v1881
    %v2220 = vunpack.c.h.b16 %v1881
    %v2221 = vunpack.c.l.b16 %v1882
    %v2222 = vunpack.c.h.b16 %v1882
    %v2223 = vunpack.c.l.b16 %v1883
    %v2224 = vunpack.c.h.b16 %v1883
    %v2225 = vunpack.c.l.b16 %v1884
    %v2226 = vunpack.c.h.b16 %v1884
    %v2227 = vunpack.c.l.b16 %v1885
    %v2228 = vunpack.c.h.b16 %v1885
    %v2229 = vunpack.c.l.b16 %v1886
    %v2230 = vunpack.c.h.b16 %v1886
    %v2231 = vunpack.c.l.b16 %v1887
    %v2232 = vunpack.c.h.b16 %v1887
    %v2233 = vunpack.c.l.b16 %v1888
    %v2234 = vunpack.c.h.b16 %v1888
    %v2235 = vunpack.c.l.b16 %v1889
    %v2236 = vunpack.c.h.b16 %v1889
    %v2237 = vunpack.c.l.b16 %v1890
    %v2238 = vunpack.c.h.b16 %v1890
    %v2239 = vunpack.c.l.b16 %v1891
    %v2240 = vunpack.c.h.b16 %v1891
    %v2241 = vunpack.c.l.b16 %v1892
    %v2242 = vunpack.c.h.b16 %v1892
    %v2243 = vunpack.c.l.b16 %v1893
    %v2244 = vunpack.c.h.b16 %v1893
    %v2245 = vunpack.c.l.b16 %v1894
    %v2246 = vunpack.c.h.b16 %v1894
    %v2247 = vunpack.c.l.b16 %v1895
    %v2248 = vunpack.c.h.b16 %v1895
    %v2249 = vunpack.c.l.b16 %v1896
    %v2250 = vunpack.c.h.b16 %v1896
    %v2251 = vunpack.c.l.b16 %v1897
    %v2252 = vunpack.c.h.b16 %v1897
    %v2253 = vunpack.c.l.b16 %v1898
    %v2254 = vunpack.c.h.b16 %v1898
    %v2255 = vunpack.c.l.b16 %v1899
    %v2256 = vunpack.c.h.b16 %v1899
    %v2257 = vunpack.c.l.b16 %v1900
    %v2258 = vunpack.c.h.b16 %v1900
    %v2259 = vunpack.c.l.b16 %v1901
    %v2260 = vunpack.c.h.b16 %v1901
    %v2261 = vunpack.c.l.b16 %v1902
    %v2262 = vunpack.c.h.b16 %v1902
    %v2263 = vunpack.c.l.b16 %v1903
    %v2264 = vunpack.c.h.b16 %v1903
    %v2265 = vunpack.c.l.b16 %v1904
    %v2266 = vunpack.c.h.b16 %v1904
    %v2267 = vunpack.c.l.b16 %v1905
    %v2268 = vunpack.c.h.b16 %v1905
    %v2269 = vunpack.c.l.b16 %v1906
    %v2270 = vunpack.c.h.b16 %v1906
    %v2271 = vunpack.c.l.b16 %v1907
    %v2272 = vunpack.c.h.b16 %v1907
    %v2273 = vunpack.c.l.b16 %v1908
    %v2274 = vunpack.c.h.b16 %v1908
    %v2275 = vunpack.c.l.b16 %v1909
    %v2276 = vunpack.c.h.b16 %v1909
    %v2277 = vunpack.c.l.b16 %v1910
    %v2278 = vunpack.c.h.b16 %v1910
    %v2279 = vunpack.c.l.b16 %v1911
    %v2280 = vunpack.c.h.b16 %v1911
    %v2281 = vunpack.c.l.b16 %v1912
    %v2282 = vunpack.c.h.b16 %v1912
    %v2283 = vunpack.c.l.b16 %v1913
    %v2284 = vunpack.c.h.b16 %v1913
    %v2285 = vunpack.c.l.b16 %v1914
    %v2286 = vunpack.c.h.b16 %v1914
    %v2287 = vunpack.c.l.b16 %v1915
    %v2288 = vunpack.c.h.b16 %v1915
    %v2289 = vunpack.c.l.b16 %v1916
    %v2290 = vunpack.c.h.b16 %v1916
    %v2291 = vunpack.c.l.b16 %v1917
    %v2292 = vunpack.c.h.b16 %v1917
    %v2293 = vunpack.c.l.b16 %v1918
    %v2294 = vunpack.c.h.b16 %v1918
    %v2295 = vunpack.c.l.b16 %v1919
    %v2296 = vunpack.c.h.b16 %v1919
    %v2297 = vunpack.c.l.b16 %v1920
    %v2298 = vunpack.c.h.b16 %v1920
    %v2299 = vunpack.c.l.b16 %v1921
    %v2300 = vunpack.c.h.b16 %v1921
    %v2301 = vunpack.c.l.b16 %v1922
    %v2302 = vunpack.c.h.b16 %v1922
    %v2303 = vunpack.c.l.b16 %v1923
    %v2304 = vunpack.c.h.b16 %v1923
    %v2305 = vunpack.c.l.b16 %v1924
    %v2306 = vunpack.c.h.b16 %v1924
    %v2307 = vunpack.c.l.b16 %v1925
    %v2308 = vunpack.c.h.b16 %v1925
    %v2309 = vunpack.c.l.b16 %v1926
    %v2310 = vunpack.c.h.b16 %v1926
    %v2311 = vunpack.c.l.b16 %v1927
    %v2312 = vunpack.c.h.b16 %v1927
    %v2313 = vunpack.c.l.b16 %v1928
    %v2314 = vunpack.c.h.b16 %v1928
    %v2315 = vunpack.c.l.b16 %v1929
    %v2316 = vunpack.c.h.b16 %v1929
    %v2317 = vunpack.c.l.b16 %v1930
    %v2318 = vunpack.c.h.b16 %v1930
    %v2319 = vunpack.c.l.b16 %v1931
    %v2320 = vunpack.c.h.b16 %v1931
    %v2321 = vunpack.c.l.b16 %v1932
    %v2322 = vunpack.c.h.b16 %v1932
    %v2323 = vunpack.c.l.b16 %v1933
    %v2324 = vunpack.c.h.b16 %v1933
    %v2325 = vunpack.c.l.b16 %v1934
    %v2326 = vunpack.c.h.b16 %v1934
    %v2327 = vunpack.c.l.b16 %v1935
    %v2328 = vunpack.c.h.b16 %v1935
    %v2329 = vunpack.c.l.b16 %v1936
    %v2330 = vunpack.c.h.b16 %v1936
    %v2331 = vunpack.c.l.b16 %v1937
    %v2332 = vunpack.c.h.b16 %v1937
    %v2333 = vunpack.c.l.b16 %v1938
    %v2334 = vunpack.c.h.b16 %v1938
    %v2335 = vunpack.c.l.b16 %v1939
    %v2336 = vunpack.c.h.b16 %v1939
    %v2337 = vunpack.c.l.b16 %v1940
    %v2338 = vunpack.c.h.b16 %v1940
    %v2339 = vunpack.c.l.b16 %v1941
    %v2340 = vunpack.c.h.b16 %v1941
    %v2341 = vunpack.c.l.b16 %v1942
    %v2342 = vunpack.c.h.b16 %v1942
    %v2343 = vunpack.c.l.b16 %v1943
    %v2344 = vunpack.c.h.b16 %v1943
    %v2345 = vunpack.c.l.b16 %v1944
    %v2346 = vunpack.c.h.b16 %v1944
    %v2347 = vunpack.c.l.b16 %v1945
    %v2348 = vunpack.c.h.b16 %v1945
    %v2349 = vunpack.c.l.b16 %v1946
    %v2350 = vunpack.c.h.b16 %v1946
    %v2351 = vunpack.c.l.b16 %v1947
    %v2352 = vunpack.c.h.b16 %v1947
    %v2353 = vunpack.c.l.b16 %v1948
    %v2354 = vunpack.c.h.b16 %v1948
    %v2355 = vpack.c.b16 %v2103, %v2099
    %v2356 = vpack.c.b16 %v2104, %v2100
    %v2357 = vpack.c.b16 %v2105, %v2101
    %v2358 = vpack.c.b16 %v2106, %v2102
    %v2359 = vpack.c.b16 %v2111, %v2107
    %v2360 = vpack.c.b16 %v2112, %v2108
    %v2361 = vpack.c.b16 %v2113, %v2109
    %v2362 = vpack.c.b16 %v2114, %v2110
    %v2363 = vpack.c.b16 %v2119, %v2115
    %v2364 = vpack.c.b16 %v2120, %v2116
    %v2365 = vpack.c.b16 %v2121, %v2117
    %v2366 = vpack.c.b16 %v2122, %v2118
    %v2367 = vpack.c.b16 %v2127, %v2123
    %v2368 = vpack.c.b16 %v2128, %v2124
    %v2369 = vpack.c.b16 %v2129, %v2125
    %v2370 = vpack.c.b16 %v2130, %v2126
    %v2371 = vpack.c.b16 %v2135, %v2131
    %v2372 = vpack.c.b16 %v2136, %v2132
    %v2373 = vpack.c.b16 %v2137, %v2133
    %v2374 = vpack.c.b16 %v2138, %v2134
    %v2375 = vpack.c.b16 %v2143, %v2139
    %v2376 = vpack.c.b16 %v2144, %v2140
    %v2377 = vpack.c.b16 %v2145, %v2141
    %v2378 = vpack.c.b16 %v2146, %v2142
    %v2379 = vpack.c.b16 %v2151, %v2147
    %v2380 = vpack.c.b16 %v2152, %v2148
    %v2381 = vpack.c.b16 %v2153, %v2149
    %v2382 = vpack.c.b16 %v2154, %v2150
    %v2383 = vpack.c.b16 %v2159, %v2155
    %v2384 = vpack.c.b16 %v2160, %v2156
    %v2385 = vpack.c.b16 %v2161, %v2157
    %v2386 = vpack.c.b16 %v2162, %v2158
    %v2387 = vpack.c.b16 %v2167, %v2163
    %v2388 = vpack.c.b16 %v2168, %v2164
    %v2389 = vpack.c.b16 %v2169, %v2165
    %v2390 = vpack.c.b16 %v2170, %v2166
    %v2391 = vpack.c.b16 %v2175, %v2171
    %v2392 = vpack.c.b16 %v2176, %v2172
    %v2393 = vpack.c.b16 %v2177, %v2173
    %v2394 = vpack.c.b16 %v2178, %v2174
    %v2395 = vpack.c.b16 %v2183, %v2179
    %v2396 = vpack.c.b16 %v2184, %v2180
    %v2397 = vpack.c.b16 %v2185, %v2181
    %v2398 = vpack.c.b16 %v2186, %v2182
    %v2399 = vpack.c.b16 %v2191, %v2187
    %v2400 = vpack.c.b16 %v2192, %v2188
    %v2401 = vpack.c.b16 %v2193, %v2189
    %v2402 = vpack.c.b16 %v2194, %v2190
    %v2403 = vpack.c.b16 %v2199, %v2195
    %v2404 = vpack.c.b16 %v2200, %v2196
    %v2405 = vpack.c.b16 %v2201, %v2197
    %v2406 = vpack.c.b16 %v2202, %v2198
    %v2407 = vpack.c.b16 %v2207, %v2203
    %v2408 = vpack.c.b16 %v2208, %v2204
    %v2409 = vpack.c.b16 %v2209, %v2205
    %v2410 = vpack.c.b16 %v2210, %v2206
    %v2411 = vpack.c.b16 %v2215, %v2211
    %v2412 = vpack.c.b16 %v2216, %v2212
    %v2413 = vpack.c.b16 %v2217, %v2213
    %v2414 = vpack.c.b16 %v2218, %v2214
    %v2415 = vpack.c.b16 %v2223, %v2219
    %v2416 = vpack.c.b16 %v2224, %v2220
    %v2417 = vpack.c.b16 %v2225, %v2221
    %v2418 = vpack.c.b16 %v2226, %v2222
    %v2419 = vpack.c.b16 %v2231, %v2227
    %v2420 = vpack.c.b16 %v2232, %v2228
    %v2421 = vpack.c.b16 %v2233, %v2229
    %v2422 = vpack.c.b16 %v2234, %v2230
    %v2423 = vpack.c.b16 %v2239, %v2235
    %v2424 = vpack.c.b16 %v2240, %v2236
    %v2425 = vpack.c.b16 %v2241, %v2237
    %v2426 = vpack.c.b16 %v2242, %v2238
    %v2427 = vpack.c.b16 %v2247, %v2243
    %v2428 = vpack.c.b16 %v2248, %v2244
    %v2429 = vpack.c.b16 %v2249, %v2245
    %v2430 = vpack.c.b16 %v2250, %v2246
    %v2431 = vpack.c.b16 %v2255, %v2251
    %v2432 = vpack.c.b16 %v2256, %v2252
    %v2433 = vpack.c.b16 %v2257, %v2253
    %v2434 = vpack.c.b16 %v2258, %v2254
    %v2435 = vpack.c.b16 %v2263, %v2259
    %v2436 = vpack.c.b16 %v2264, %v2260
    %v2437 = vpack.c.b16 %v2265, %v2261
    %v2438 = vpack.c.b16 %v2266, %v2262
    %v2439 = vpack.c.b16 %v2271, %v2267
    %v2440 = vpack.c.b16 %v2272, %v2268
    %v2441 = vpack.c.b16 %v2273, %v2269
    %v2442 = vpack.c.b16 %v2274, %v2270
    %v2443 = vpack.c.b16 %v2279, %v2275
    %v2444 = vpack.c.b16 %v2280, %v2276
    %v2445 = vpack.c.b16 %v2281, %v2277
    %v2446 = vpack.c.b16 %v2282, %v2278
    %v2447 = vpack.c.b16 %v2287, %v2283
    %v2448 = vpack.c.b16 %v2288, %v2284
    %v2449 = vpack.c.b16 %v2289, %v2285
    %v2450 = vpack.c.b16 %v2290, %v2286
    %v2451 = vpack.c.b16 %v2295, %v2291
    %v2452 = vpack.c.b16 %v2296, %v2292
    %v2453 = vpack.c.b16 %v2297, %v2293
    %v2454 = vpack.c.b16 %v2298, %v2294
    %v2455 = vpack.c.b16 %v2303, %v2299
    %v2456 = vpack.c.b16 %v2304, %v2300
    %v2457 = vpack.c.b16 %v2305, %v2301
    %v2458 = vpack.c.b16 %v2306, %v2302
    %v2459 = vpack.c.b16 %v2311, %v2307
    %v2460 = vpack.c.b16 %v2312, %v2308
    %v2461 = vpack.c.b16 %v2313, %v2309
    %v2462 = vpack.c.b16 %v2314, %v2310
    %v2463 = vpack.c.b16 %v2319, %v2315
    %v2464 = vpack.c.b16 %v2320, %v2316
    %v2465 = vpack.c.b16 %v2321, %v2317
    %v2466 = vpack.c.b16 %v2322, %v2318
    %v2467 = vpack.c.b16 %v2327, %v2323
    %v2468 = vpack.c.b16 %v2328, %v2324
    %v2469 = vpack.c.b16 %v2329, %v2325
    %v2470 = vpack.c.b16 %v2330, %v2326
    %v2471 = vpack.c.b16 %v2335, %v2331
    %v2472 = vpack.c.b16 %v2336, %v2332
    %v2473 = vpack.c.b16 %v2337, %v2333
    %v2474 = vpack.c.b16 %v2338, %v2334
    %v2475 = vpack.c.b16 %v2343, %v2339
    %v2476 = vpack.c.b16 %v2344, %v2340
    %v2477 = vpack.c.b16 %v2345, %v2341
    %v2478 = vpack.c.b16 %v2346, %v2342
    %v2479 = vpack.c.b16 %v2351, %v2347
    %v2480 = vpack.c.b16 %v2352, %v2348
    %v2481 = vpack.c.b16 %v2353, %v2349
    %v2482 = vpack.c.b16 %v2354, %v2350
    %2611 = vmatprep.subr.bf16.mxu0 %v2384
    %2612 = vmatpush1.bf16.msra.mxu0 %v2383
    %2613 = vmatprep.subr.bf16.mxu0 %v2380
    %2614 = vmatpush1.bf16.msra.mxu0 %v2379
    %2615 = vmatprep.subr.bf16.mxu0 %v2376
    %2616 = vmatpush1.bf16.msra.mxu0 %v2375
    %2617 = vmatprep.subr.bf16.mxu0 %v2372
    %2618 = vmatpush1.bf16.msra.mxu0 %v2371
    %2619 = vmatprep.subr.bf16.mxu0 %v2368
    %2620 = vmatpush1.bf16.msra.mxu0 %v2367
    %2621 = vmatprep.subr.bf16.mxu0 %v2364
    %2622 = vmatpush1.bf16.msra.mxu0 %v2363
    %2623 = vmatprep.subr.bf16.mxu0 %v2360
    %2624 = vmatpush1.bf16.msra.mxu0 %v2359
    %2625 = vmatprep.subr.bf16.mxu0 %v2356
    %2626 = vmatpush1.bf16.msra.mxu0 %v2355
    %2627 = vmatprep.subr.bf16.mxu0 %v2416
    %2628 = vmatpush2.bf16.msra.mxu0 %v2415
    %2629 = vmatprep.subr.bf16.mxu0 %v2412
    %2630 = vmatpush2.bf16.msra.mxu0 %v2411
    %2631 = vmatprep.subr.bf16.mxu0 %v2408
    %2632 = vmatpush2.bf16.msra.mxu0 %v2407
    %2633 = vmatprep.subr.bf16.mxu0 %v2404
    %2634 = vmatpush2.bf16.msra.mxu0 %v2403
    %2635 = vmatprep.subr.bf16.mxu0 %v2400
    %2636 = vmatpush2.bf16.msra.mxu0 %v2399
    %2637 = vmatprep.subr.bf16.mxu0 %v2396
    %2638 = vmatpush2.bf16.msra.mxu0 %v2395
    %2639 = vmatprep.subr.bf16.mxu0 %v2392
    %2640 = vmatpush2.bf16.msra.mxu0 %v2391
    %2641 = vmatprep.subr.bf16.mxu0 %v2388
    %2642 = vmatpush2.bf16.msra.mxu0 %v2387
    %2643 = vmatprep.mubr.bf16.mxu0 %v1818
    %2644 = vmatmul.mubr.bf16.gmra.mxu0 %v1817
    %v2645 = vpop.f32.mrf.mxu0
    %v2646 = vadd.f32 %v1954, %v2645
    %v2647 = vpop.f32.mrf.mxu0
    %v2648 = vadd.f32 %v1958, %v2647
    %v2649 = vpop.f32.mrf.mxu0
    %v2650 = vadd.f32 %v1954, %v2649
    %v2651 = vpop.f32.mrf.mxu0
    %v2652 = vadd.f32 %v1958, %v2651
    %2653 = vdwg.mxu0
    %2654 = vmatprep.subr.bf16.mxu0 %v2448
    %2655 = vmatpush1.bf16.msra.mxu0 %v2447
    %2656 = vmatprep.subr.bf16.mxu0 %v2444
    %2657 = vmatpush1.bf16.msra.mxu0 %v2443
    %2658 = vmatprep.subr.bf16.mxu0 %v2440
    %2659 = vmatpush1.bf16.msra.mxu0 %v2439
    %2660 = vmatprep.subr.bf16.mxu0 %v2436
    %2661 = vmatpush1.bf16.msra.mxu0 %v2435
    %2662 = vmatprep.subr.bf16.mxu0 %v2432
    %2663 = vmatpush1.bf16.msra.mxu0 %v2431
    %2664 = vmatprep.subr.bf16.mxu0 %v2428
    %2665 = vmatpush1.bf16.msra.mxu0 %v2427
    %2666 = vmatprep.subr.bf16.mxu0 %v2424
    %2667 = vmatpush1.bf16.msra.mxu0 %v2423
    %2668 = vmatprep.subr.bf16.mxu0 %v2420
    %2669 = vmatpush1.bf16.msra.mxu0 %v2419
    %2670 = vmatprep.subr.bf16.mxu0 %v2480
    %2671 = vmatpush2.bf16.msra.mxu0 %v2479
    %2672 = vmatprep.subr.bf16.mxu0 %v2476
    %2673 = vmatpush2.bf16.msra.mxu0 %v2475
    %2674 = vmatprep.subr.bf16.mxu0 %v2472
    %2675 = vmatpush2.bf16.msra.mxu0 %v2471
    %2676 = vmatprep.subr.bf16.mxu0 %v2468
    %2677 = vmatpush2.bf16.msra.mxu0 %v2467
    %2678 = vmatprep.subr.bf16.mxu0 %v2464
    %2679 = vmatpush2.bf16.msra.mxu0 %v2463
    %2680 = vmatprep.subr.bf16.mxu0 %v2460
    %2681 = vmatpush2.bf16.msra.mxu0 %v2459
    %2682 = vmatprep.subr.bf16.mxu0 %v2456
    %2683 = vmatpush2.bf16.msra.mxu0 %v2455
    %2684 = vmatprep.subr.bf16.mxu0 %v2452
    %2685 = vmatpush2.bf16.msra.mxu0 %v2451
    %2686 = vmatprep.mubr.bf16.mxu0 %v1820
    %2687 = vmatmul.mubr.bf16.gmra.mxu0 %v1819
    %v2688 = vpop.f32.mrf.mxu0
    %v2689 = vadd.f32 %v2646, %v2688
    %v2690 = vpop.f32.mrf.mxu0
    %v2691 = vadd.f32 %v2648, %v2690
    %v2692 = vpop.f32.mrf.mxu0
    %v2693 = vadd.f32 %v2650, %v2692
    %v2694 = vpop.f32.mrf.mxu0
    %v2695 = vadd.f32 %v2652, %v2694
    %2696 = vdwg.mxu0
    %2697 = vmatprep.subr.bf16.mxu0 %v2386
    %2698 = vmatpush1.bf16.msra.mxu0 %v2385
    %2699 = vmatprep.subr.bf16.mxu0 %v2382
    %2700 = vmatpush1.bf16.msra.mxu0 %v2381
    %2701 = vmatprep.subr.bf16.mxu0 %v2378
    %2702 = vmatpush1.bf16.msra.mxu0 %v2377
    %2703 = vmatprep.subr.bf16.mxu0 %v2374
    %2704 = vmatpush1.bf16.msra.mxu0 %v2373
    %2705 = vmatprep.subr.bf16.mxu0 %v2370
    %2706 = vmatpush1.bf16.msra.mxu0 %v2369
    %2707 = vmatprep.subr.bf16.mxu0 %v2366
    %2708 = vmatpush1.bf16.msra.mxu0 %v2365
    %2709 = vmatprep.subr.bf16.mxu0 %v2362
    %2710 = vmatpush1.bf16.msra.mxu0 %v2361
    %2711 = vmatprep.subr.bf16.mxu0 %v2358
    %2712 = vmatpush1.bf16.msra.mxu0 %v2357
    %2713 = vmatprep.subr.bf16.mxu0 %v2418
    %2714 = vmatpush2.bf16.msra.mxu0 %v2417
    %2715 = vmatprep.subr.bf16.mxu0 %v2414
    %2716 = vmatpush2.bf16.msra.mxu0 %v2413
    %2717 = vmatprep.subr.bf16.mxu0 %v2410
    %2718 = vmatpush2.bf16.msra.mxu0 %v2409
    %2719 = vmatprep.subr.bf16.mxu0 %v2406
    %2720 = vmatpush2.bf16.msra.mxu0 %v2405
    %2721 = vmatprep.subr.bf16.mxu0 %v2402
    %2722 = vmatpush2.bf16.msra.mxu0 %v2401
    %2723 = vmatprep.subr.bf16.mxu0 %v2398
    %2724 = vmatpush2.bf16.msra.mxu0 %v2397
    %2725 = vmatprep.subr.bf16.mxu0 %v2394
    %2726 = vmatpush2.bf16.msra.mxu0 %v2393
    %2727 = vmatprep.subr.bf16.mxu0 %v2390
    %2728 = vmatpush2.bf16.msra.mxu0 %v2389
    %2729 = vmatprep.mubr.bf16.mxu0 %v1818
    %2730 = vmatmul.mubr.bf16.gmra.mxu0 %v1817
    %v2731 = vpop.f32.mrf.mxu0
    %v2732 = vadd.f32 %v1962, %v2731
    %v2733 = vpop.f32.mrf.mxu0
    %v2734 = vadd.f32 %v1966, %v2733
    %v2735 = vpop.f32.mrf.mxu0
    %v2736 = vadd.f32 %v1962, %v2735
    %v2737 = vpop.f32.mrf.mxu0
    %v2738 = vadd.f32 %v1966, %v2737
    %2739 = vdwg.mxu0
    %2740 = vmatprep.subr.bf16.mxu0 %v2450
    %2741 = vmatpush1.bf16.msra.mxu0 %v2449
    %2742 = vmatprep.subr.bf16.mxu0 %v2446
    %2743 = vmatpush1.bf16.msra.mxu0 %v2445
    %2744 = vmatprep.subr.bf16.mxu0 %v2442
    %2745 = vmatpush1.bf16.msra.mxu0 %v2441
    %2746 = vmatprep.subr.bf16.mxu0 %v2438
    %2747 = vmatpush1.bf16.msra.mxu0 %v2437
    %2748 = vmatprep.subr.bf16.mxu0 %v2434
    %2749 = vmatpush1.bf16.msra.mxu0 %v2433
    %2750 = vmatprep.subr.bf16.mxu0 %v2430
    %2751 = vmatpush1.bf16.msra.mxu0 %v2429
    %2752 = vmatprep.subr.bf16.mxu0 %v2426
    %2753 = vmatpush1.bf16.msra.mxu0 %v2425
    %2754 = vmatprep.subr.bf16.mxu0 %v2422
    %2755 = vmatpush1.bf16.msra.mxu0 %v2421
    %2756 = vmatprep.subr.bf16.mxu0 %v2482
    %2757 = vmatpush2.bf16.msra.mxu0 %v2481
    %2758 = vmatprep.subr.bf16.mxu0 %v2478
    %2759 = vmatpush2.bf16.msra.mxu0 %v2477
    %2760 = vmatprep.subr.bf16.mxu0 %v2474
    %2761 = vmatpush2.bf16.msra.mxu0 %v2473
    %2762 = vmatprep.subr.bf16.mxu0 %v2470
    %2763 = vmatpush2.bf16.msra.mxu0 %v2469
    %2764 = vmatprep.subr.bf16.mxu0 %v2466
    %2765 = vmatpush2.bf16.msra.mxu0 %v2465
    %2766 = vmatprep.subr.bf16.mxu0 %v2462
    %2767 = vmatpush2.bf16.msra.mxu0 %v2461
    %2768 = vmatprep.subr.bf16.mxu0 %v2458
    %2769 = vmatpush2.bf16.msra.mxu0 %v2457
    %2770 = vmatprep.subr.bf16.mxu0 %v2454
    %2771 = vmatpush2.bf16.msra.mxu0 %v2453
    %2772 = vmatprep.mubr.bf16.mxu0 %v1820
    %2773 = vmatmul.mubr.bf16.gmra.mxu0 %v1819
    %v2774 = vpop.f32.mrf.mxu0
    %v2775 = vadd.f32 %v2732, %v2774
    %v2776 = vpop.f32.mrf.mxu0
    %v2777 = vadd.f32 %v2734, %v2776
    %v2778 = vpop.f32.mrf.mxu0
    %v2779 = vadd.f32 %v2736, %v2778
    %v2780 = vpop.f32.mrf.mxu0
    %v2781 = vadd.f32 %v2738, %v2780
    %2782 = vdwg.mxu0
    %v2783 = vmax.f32 %v2689, 0.0
    %v2784 = vmax.f32 %v2691, 0.0
    %v2785 = vmax.f32 %v2775, 0.0
    %v2786 = vmax.f32 %v2777, 0.0
    %v2787 = vmax.f32 %v2693, 0.0
    %v2788 = vmax.f32 %v2695, 0.0
    %v2789 = vmax.f32 %v2779, 0.0
    %v2790 = vmax.f32 %v2781, 0.0
    %v2791 = vpack.c.bf16 %v2787, %v2783
    %v2792 = vpack.c.bf16 %v2788, %v2784
    %v2793 = vpack.c.bf16 %v2789, %v2785
    %v2794 = vpack.c.bf16 %v2790, %v2786
    %v2795 = vld [vmem:[%s5] sm:$0xf]
    %v2796 = vld [vmem:[%s5 + $0x4] sm:$0xf]
    %v2797 = vld [vmem:[%s5 + $0x8] sm:$0xf]
    %v2798 = vld [vmem:[%s5 + $0xc] sm:$0xf]
    %v2799 = vld [vmem:[%s5 + $0x10] sm:$0xf]
    %v2800 = vld [vmem:[%s5 + $0x14] sm:$0xf]
    %v2801 = vld [vmem:[%s5 + $0x18] sm:$0xf]
    %v2802 = vld [vmem:[%s5 + $0x1c] sm:$0xf]
    %v2803 = vld [vmem:[%s5 + $0x20] sm:$0xf]
    %v2804 = vld [vmem:[%s5 + $0x24] sm:$0xf]
    %v2805 = vld [vmem:[%s5 + $0x28] sm:$0xf]
    %v2806 = vld [vmem:[%s5 + $0x2c] sm:$0xf]
    %v2807 = vld [vmem:[%s5 + $0x30] sm:$0xf]
    %v2808 = vld [vmem:[%s5 + $0x34] sm:$0xf]
    %v2809 = vld [vmem:[%s5 + $0x38] sm:$0xf]
    %v2810 = vld [vmem:[%s5 + $0x3c] sm:$0xf]
    %v2811 = vld [vmem:[%s5 + $0x40] sm:$0xf]
    %v2812 = vld [vmem:[%s5 + $0x44] sm:$0xf]
    %v2813 = vld [vmem:[%s5 + $0x48] sm:$0xf]
    %v2814 = vld [vmem:[%s5 + $0x4c] sm:$0xf]
    %v2815 = vld [vmem:[%s5 + $0x50] sm:$0xf]
    %v2816 = vld [vmem:[%s5 + $0x54] sm:$0xf]
    %v2817 = vld [vmem:[%s5 + $0x58] sm:$0xf]
    %v2818 = vld [vmem:[%s5 + $0x5c] sm:$0xf]
    %v2819 = vld [vmem:[%s5 + $0x60] sm:$0xf]
    %v2820 = vld [vmem:[%s5 + $0x64] sm:$0xf]
    %v2821 = vld [vmem:[%s5 + $0x68] sm:$0xf]
    %v2822 = vld [vmem:[%s5 + $0x6c] sm:$0xf]
    %v2823 = vld [vmem:[%s5 + $0x70] sm:$0xf]
    %v2824 = vld [vmem:[%s5 + $0x74] sm:$0xf]
    %v2825 = vld [vmem:[%s5 + $0x78] sm:$0xf]
    %v2826 = vld [vmem:[%s5 + $0x7c] sm:$0xf]
    %v2827 = vld [vmem:[%s5 + $0x80] sm:$0xf]
    %v2828 = vld [vmem:[%s5 + $0x84] sm:$0xf]
    %v2829 = vld [vmem:[%s5 + $0x88] sm:$0xf]
    %v2830 = vld [vmem:[%s5 + $0x8c] sm:$0xf]
    %v2831 = vld [vmem:[%s5 + $0x90] sm:$0xf]
    %v2832 = vld [vmem:[%s5 + $0x94] sm:$0xf]
    %v2833 = vld [vmem:[%s5 + $0x98] sm:$0xf]
    %v2834 = vld [vmem:[%s5 + $0x9c] sm:$0xf]
    %v2835 = vld [vmem:[%s5 + $0xa0] sm:$0xf]
    %v2836 = vld [vmem:[%s5 + $0xa4] sm:$0xf]
    %v2837 = vld [vmem:[%s5 + $0xa8] sm:$0xf]
    %v2838 = vld [vmem:[%s5 + $0xac] sm:$0xf]
    %v2839 = vld [vmem:[%s5 + $0xb0] sm:$0xf]
    %v2840 = vld [vmem:[%s5 + $0xb4] sm:$0xf]
    %v2841 = vld [vmem:[%s5 + $0xb8] sm:$0xf]
    %v2842 = vld [vmem:[%s5 + $0xbc] sm:$0xf]
    %v2843 = vld [vmem:[%s5 + $0xc0] sm:$0xf]
    %v2844 = vld [vmem:[%s5 + $0xc4] sm:$0xf]
    %v2845 = vld [vmem:[%s5 + $0xc8] sm:$0xf]
    %v2846 = vld [vmem:[%s5 + $0xcc] sm:$0xf]
    %v2847 = vld [vmem:[%s5 + $0xd0] sm:$0xf]
    %v2848 = vld [vmem:[%s5 + $0xd4] sm:$0xf]
    %v2849 = vld [vmem:[%s5 + $0xd8] sm:$0xf]
    %v2850 = vld [vmem:[%s5 + $0xdc] sm:$0xf]
    %v2851 = vld [vmem:[%s5 + $0xe0] sm:$0xf]
    %v2852 = vld [vmem:[%s5 + $0xe4] sm:$0xf]
    %v2853 = vld [vmem:[%s5 + $0xe8] sm:$0xf]
    %v2854 = vld [vmem:[%s5 + $0xec] sm:$0xf]
    %v2855 = vld [vmem:[%s5 + $0xf0] sm:$0xf]
    %v2856 = vld [vmem:[%s5 + $0xf4] sm:$0xf]
    %v2857 = vld [vmem:[%s5 + $0xf8] sm:$0xf]
    %v2858 = vld [vmem:[%s5 + $0xfc] sm:$0xf]
    %v2859 = vld [vmem:[%s6] sm:$0x1]
    %v2861 = vlaneseq
    %v2862 = vshrl.u32 %v2861, 7
    %v2863 = vsub.s32 0, %v2862
    %v2864 = vrot.slane %v2859, %v2863
    %v2930 = vunpack.c.l.b16 %v2795
    %v2931 = vunpack.c.l.b16 %v2796
    %v2932 = vunpack.c.l.b16 %v2797
    %v2933 = vunpack.c.l.b16 %v2798
    %v2934 = vunpack.c.l.b16 %v2799
    %v2935 = vunpack.c.l.b16 %v2800
    %v2936 = vunpack.c.l.b16 %v2801
    %v2937 = vunpack.c.l.b16 %v2802
    %v2938 = vunpack.c.l.b16 %v2803
    %v2939 = vunpack.c.l.b16 %v2804
    %v2940 = vunpack.c.l.b16 %v2805
    %v2941 = vunpack.c.l.b16 %v2806
    %v2942 = vunpack.c.l.b16 %v2807
    %v2943 = vunpack.c.l.b16 %v2808
    %v2944 = vunpack.c.l.b16 %v2809
    %v2945 = vunpack.c.l.b16 %v2810
    %v2946 = vunpack.c.l.b16 %v2811
    %v2947 = vunpack.c.l.b16 %v2812
    %v2948 = vunpack.c.l.b16 %v2813
    %v2949 = vunpack.c.l.b16 %v2814
    %v2950 = vunpack.c.l.b16 %v2815
    %v2951 = vunpack.c.l.b16 %v2816
    %v2952 = vunpack.c.l.b16 %v2817
    %v2953 = vunpack.c.l.b16 %v2818
    %v2954 = vunpack.c.l.b16 %v2819
    %v2955 = vunpack.c.l.b16 %v2820
    %v2956 = vunpack.c.l.b16 %v2821
    %v2957 = vunpack.c.l.b16 %v2822
    %v2958 = vunpack.c.l.b16 %v2823
    %v2959 = vunpack.c.l.b16 %v2824
    %v2960 = vunpack.c.l.b16 %v2825
    %v2961 = vunpack.c.l.b16 %v2826
    %v2962 = vunpack.c.l.b16 %v2827
    %v2963 = vunpack.c.l.b16 %v2828
    %v2964 = vunpack.c.l.b16 %v2829
    %v2965 = vunpack.c.l.b16 %v2830
    %v2966 = vunpack.c.l.b16 %v2831
    %v2967 = vunpack.c.l.b16 %v2832
    %v2968 = vunpack.c.l.b16 %v2833
    %v2969 = vunpack.c.l.b16 %v2834
    %v2970 = vunpack.c.l.b16 %v2835
    %v2971 = vunpack.c.l.b16 %v2836
    %v2972 = vunpack.c.l.b16 %v2837
    %v2973 = vunpack.c.l.b16 %v2838
    %v2974 = vunpack.c.l.b16 %v2839
    %v2975 = vunpack.c.l.b16 %v2840
    %v2976 = vunpack.c.l.b16 %v2841
    %v2977 = vunpack.c.l.b16 %v2842
    %v2978 = vunpack.c.l.b16 %v2843
    %v2979 = vunpack.c.l.b16 %v2844
    %v2980 = vunpack.c.l.b16 %v2845
    %v2981 = vunpack.c.l.b16 %v2846
    %v2982 = vunpack.c.l.b16 %v2847
    %v2983 = vunpack.c.l.b16 %v2848
    %v2984 = vunpack.c.l.b16 %v2849
    %v2985 = vunpack.c.l.b16 %v2850
    %v2986 = vunpack.c.l.b16 %v2851
    %v2987 = vunpack.c.l.b16 %v2852
    %v2988 = vunpack.c.l.b16 %v2853
    %v2989 = vunpack.c.l.b16 %v2854
    %v2990 = vunpack.c.l.b16 %v2855
    %v2991 = vunpack.c.l.b16 %v2856
    %v2992 = vunpack.c.l.b16 %v2857
    %v2993 = vunpack.c.l.b16 %v2858
    %v2994 = vpack.c.b16 %v2931, %v2930
    %v2995 = vpack.c.b16 %v2933, %v2932
    %v2996 = vpack.c.b16 %v2935, %v2934
    %v2997 = vpack.c.b16 %v2937, %v2936
    %v2998 = vpack.c.b16 %v2939, %v2938
    %v2999 = vpack.c.b16 %v2941, %v2940
    %v3000 = vpack.c.b16 %v2943, %v2942
    %v3001 = vpack.c.b16 %v2945, %v2944
    %v3002 = vpack.c.b16 %v2947, %v2946
    %v3003 = vpack.c.b16 %v2949, %v2948
    %v3004 = vpack.c.b16 %v2951, %v2950
    %v3005 = vpack.c.b16 %v2953, %v2952
    %v3006 = vpack.c.b16 %v2955, %v2954
    %v3007 = vpack.c.b16 %v2957, %v2956
    %v3008 = vpack.c.b16 %v2959, %v2958
    %v3009 = vpack.c.b16 %v2961, %v2960
    %v3010 = vpack.c.b16 %v2963, %v2962
    %v3011 = vpack.c.b16 %v2965, %v2964
    %v3012 = vpack.c.b16 %v2967, %v2966
    %v3013 = vpack.c.b16 %v2969, %v2968
    %v3014 = vpack.c.b16 %v2971, %v2970
    %v3015 = vpack.c.b16 %v2973, %v2972
    %v3016 = vpack.c.b16 %v2975, %v2974
    %v3017 = vpack.c.b16 %v2977, %v2976
    %v3018 = vpack.c.b16 %v2979, %v2978
    %v3019 = vpack.c.b16 %v2981, %v2980
    %v3020 = vpack.c.b16 %v2983, %v2982
    %v3021 = vpack.c.b16 %v2985, %v2984
    %v3022 = vpack.c.b16 %v2987, %v2986
    %v3023 = vpack.c.b16 %v2989, %v2988
    %v3024 = vpack.c.b16 %v2991, %v2990
    %v3025 = vpack.c.b16 %v2993, %v2992
    %3058 = vmatprep.subr.bf16.mxu0 0
    %3059 = vmatpush1.bf16.msra.mxu0 %v3001
    %3060 = vmatprep.subr.bf16.mxu0 0
    %3061 = vmatpush1.bf16.msra.mxu0 %v3000
    %3062 = vmatprep.subr.bf16.mxu0 0
    %3063 = vmatpush1.bf16.msra.mxu0 %v2999
    %3064 = vmatprep.subr.bf16.mxu0 0
    %3065 = vmatpush1.bf16.msra.mxu0 %v2998
    %3066 = vmatprep.subr.bf16.mxu0 0
    %3067 = vmatpush1.bf16.msra.mxu0 %v2997
    %3068 = vmatprep.subr.bf16.mxu0 0
    %3069 = vmatpush1.bf16.msra.mxu0 %v2996
    %3070 = vmatprep.subr.bf16.mxu0 0
    %3071 = vmatpush1.bf16.msra.mxu0 %v2995
    %3072 = vmatprep.subr.bf16.mxu0 0
    %3073 = vmatpush1.bf16.msra.mxu0 %v2994
    %3074 = vmatprep.subr.bf16.mxu0 0
    %3075 = vmatpush2.bf16.msra.mxu0 %v3009
    %3076 = vmatprep.subr.bf16.mxu0 0
    %3077 = vmatpush2.bf16.msra.mxu0 %v3008
    %3078 = vmatprep.subr.bf16.mxu0 0
    %3079 = vmatpush2.bf16.msra.mxu0 %v3007
    %3080 = vmatprep.subr.bf16.mxu0 0
    %3081 = vmatpush2.bf16.msra.mxu0 %v3006
    %3082 = vmatprep.subr.bf16.mxu0 0
    %3083 = vmatpush2.bf16.msra.mxu0 %v3005
    %3084 = vmatprep.subr.bf16.mxu0 0
    %3085 = vmatpush2.bf16.msra.mxu0 %v3004
    %3086 = vmatprep.subr.bf16.mxu0 0
    %3087 = vmatpush2.bf16.msra.mxu0 %v3003
    %3088 = vmatprep.subr.bf16.mxu0 0
    %3089 = vmatpush2.bf16.msra.mxu0 %v3002
    %3090 = vmatprep.mubr.bf16.mxu0 %v2792
    %3091 = vmatmul.mubr.bf16.gmra.mxu0 %v2791
    %v3092 = vpop.f32.mrf.mxu0
    %v3093 = vadd.f32 %v2864, %v3092
    %v3094 = vpop.f32.mrf.mxu0
    %v3095 = vpop.f32.mrf.mxu0
    %v3096 = vadd.f32 %v2864, %v3095
    %v3097 = vpop.f32.mrf.mxu0
    %3098 = vdwg.mxu0
    %3099 = vmatprep.subr.bf16.mxu0 0
    %3100 = vmatpush1.bf16.msra.mxu0 %v3017
    %3101 = vmatprep.subr.bf16.mxu0 0
    %3102 = vmatpush1.bf16.msra.mxu0 %v3016
    %3103 = vmatprep.subr.bf16.mxu0 0
    %3104 = vmatpush1.bf16.msra.mxu0 %v3015
    %3105 = vmatprep.subr.bf16.mxu0 0
    %3106 = vmatpush1.bf16.msra.mxu0 %v3014
    %3107 = vmatprep.subr.bf16.mxu0 0
    %3108 = vmatpush1.bf16.msra.mxu0 %v3013
    %3109 = vmatprep.subr.bf16.mxu0 0
    %3110 = vmatpush1.bf16.msra.mxu0 %v3012
    %3111 = vmatprep.subr.bf16.mxu0 0
    %3112 = vmatpush1.bf16.msra.mxu0 %v3011
    %3113 = vmatprep.subr.bf16.mxu0 0
    %3114 = vmatpush1.bf16.msra.mxu0 %v3010
    %3115 = vmatprep.subr.bf16.mxu0 0
    %3116 = vmatpush2.bf16.msra.mxu0 %v3025
    %3117 = vmatprep.subr.bf16.mxu0 0
    %3118 = vmatpush2.bf16.msra.mxu0 %v3024
    %3119 = vmatprep.subr.bf16.mxu0 0
    %3120 = vmatpush2.bf16.msra.mxu0 %v3023
    %3121 = vmatprep.subr.bf16.mxu0 0
    %3122 = vmatpush2.bf16.msra.mxu0 %v3022
    %3123 = vmatprep.subr.bf16.mxu0 0
    %3124 = vmatpush2.bf16.msra.mxu0 %v3021
    %3125 = vmatprep.subr.bf16.mxu0 0
    %3126 = vmatpush2.bf16.msra.mxu0 %v3020
    %3127 = vmatprep.subr.bf16.mxu0 0
    %3128 = vmatpush2.bf16.msra.mxu0 %v3019
    %3129 = vmatprep.subr.bf16.mxu0 0
    %3130 = vmatpush2.bf16.msra.mxu0 %v3018
    %3131 = vmatprep.mubr.bf16.mxu0 %v2794
    %3132 = vmatmul.mubr.bf16.gmra.mxu0 %v2793
    %v3133 = vpop.f32.mrf.mxu0
    %v3134 = vadd.f32 %v3093, %v3133
    %v3135 = vpop.f32.mrf.mxu0
    %v3136 = vpop.f32.mrf.mxu0
    %v3137 = vadd.f32 %v3096, %v3136
    %v3138 = vpop.f32.mrf.mxu0
    %3139 = vdwg.mxu0
    %3140 = vst [vmem:[%s7] sm:$0xff] %v3134
    %3141 = vst [vmem:[%s7 + $0x8] sm:$0xff] %v3137
    // Predicated region
    $region38: #{mlp_forward.1} parent=1 // pred_check
      _
    $region39: #{mlp_forward.1} parent=1 // pred_check_branch
      %3143 = sbr.rel (0) target = $region41
    $region40: #{mlp_forward.1} parent=1 // pred_region
      _
    $region41: #{mlp_forward.1} parent=1 // pred_fallthru
      _
    // Predicated region
    $region42: #{mlp_forward.1} parent=1 // pred_check
      _
    $region43: #{mlp_forward.1} parent=1 // pred_check_branch
      %3145 = sbr.rel (0) target = $region45
    $region44: #{mlp_forward.1} parent=1 // pred_region
      _
    $region45: #{mlp_forward.1} parent=1 // pred_fallthru
      _
    %3146 = vsyncpa [#allocation3], 1
    %3147 = vsyncpa [#allocation5], 1

</llo_original>
